<compile_context>
chip_gen: v7x
topology: tpu7x:2x2x1
jax: 0.10.0
libtpu: 0.0.40
codegen_flags: <defaults>
</compile_context>

<pallas_src>
import functools

import jax
import jax.numpy as jnp
from jax import lax
from jax.experimental import pallas as pl
from jax.experimental.pallas import tpu as pltpu

EPS = 1e-5
_REF_PREC = lax.Precision.HIGHEST      # reference path only


# --------------------------------------------------------------------------- kernel

def _pointwise_in_relu(t, w_ref, b_ref):
    """1x1 conv + bias + InstanceNorm2d(affine=False) + ReLU on a (Cin, HW) tile.

    t: (Cin, HW) activations (channels on sublanes, flattened spatial on lanes).
    w_ref: (Cout, Cin), b_ref: (Cout, 1).
    The K=4..8 contraction is done as Cin broadcast FMAs on the VPU in full f32.
    InstanceNorm stats use a single pass (sum and sum-of-squares).
    """
    w = w_ref[...]
    cout, cin = w.shape
    hw = t.shape[1]

    acc = jnp.broadcast_to(b_ref[...], (cout, hw))
    for ci in range(cin):
        acc = acc + w[:, ci:ci + 1] * t[ci:ci + 1, :]

    inv_hw = 1.0 / hw
    s1 = jnp.sum(acc, axis=1, keepdims=True)
    s2 = jnp.sum(acc * acc, axis=1, keepdims=True)
    mean = s1 * inv_hw
    var = jnp.maximum(s2 * inv_hw - mean * mean, 0.0)
    return jnp.maximum((acc - mean) * lax.rsqrt(var + EPS), 0.0)


def _depthwise3x3(t, dw_ref, H, W):
    """Depthwise (groups=C) 3x3 conv with padding=1 on a (C, H*W) tile.

    dw_ref: (C, 10) — columns 0..8 are the 3x3 taps (row-major), column 9 is bias.
    Each tap = lane roll of the flattened spatial axis (XLU) + iota boundary mask
    (zeros out rows/columns that would wrap around), then a broadcast FMA (VPU).
    """
    C, HW = t.shape
    taps = dw_ref[...]

    idx = lax.broadcasted_iota(jnp.int32, (1, HW), 1)     # flat spatial position
    col = idx % W
    row_ok = {-1: idx >= W, 0: None, 1: idx < (H - 1) * W}
    col_ok = {-1: col >= 1, 0: None, 1: col <= W - 2}

    acc = jnp.broadcast_to(taps[:, 9:10], (C, HW))        # depthwise bias
    for di in (-1, 0, 1):
        for dj in (-1, 0, 1):
            k = di * W + dj
            if k == 0:
                shifted = t
            else:
                # out[p] = t[p + k]  (roll follows jnp.roll semantics)
                shifted = pltpu.roll(t, (-k) % HW, axis=1)
            mask = row_ok[di]
            if col_ok[dj] is not None:
                mask = col_ok[dj] if mask is None else (mask & col_ok[dj])
            if mask is not None:
                shifted = jnp.where(mask, shifted, 0.0)
            c_idx = (di + 1) * 3 + (dj + 1)
            acc = acc + shifted * taps[:, c_idx:c_idx + 1]
    return acc


def _convblock_kernel(H, W, x_ref,
                      w1_ref, b1_ref, dw2_ref, w2_ref, b2_ref,
                      w3_ref, b3_ref, ws_ref, bs_ref,
                      o_ref):
    for b in range(x_ref.shape[0]):                       # images in this block (static)
        x = x_ref[b]                                      # (Cin, HW)
        t = _pointwise_in_relu(x, w1_ref, b1_ref)         # DSC1 (dw1 folded into pw1)
        t = _depthwise3x3(t, dw2_ref, H, W)               # DSC2 depthwise 3x3
        t = _pointwise_in_relu(t, w2_ref, b2_ref)         # DSC2 pointwise
        t = _pointwise_in_relu(t, w3_ref, b3_ref)         # DSC3 (dw3 folded into pw3)
        s = _pointwise_in_relu(x, ws_ref, bs_ref)         # shortcut (dws folded into pws)
        o_ref[b] = (t + s).astype(o_ref.dtype)


# --------------------------------------------------------------------------- wrapper

def _prepare_kernel_params(p):
    """Fold depthwise 1x1 scale/bias into the following pointwise conv (exact) and
    repack into 9 small kernel-oriented arrays."""

    def fold(dw_w, dw_b, pw_w, pw_b):
        # dw_w, dw_b: (1, Cin); pw_w: (Cin, Cout); pw_b: (1, Cout)
        wk = (pw_w * dw_w[0][:, None]).T                  # (Cout, Cin)
        bk = (dw_b[0] @ pw_w + pw_b[0])[:, None]          # (Cout, 1)
        return wk.astype(jnp.float32), bk.astype(jnp.float32)

    w1, b1 = fold(p["dw1_w"], p["dw1_b"], p["pw1_w"], p["pw1_b"])
    w3, b3 = fold(p["dw3_w"], p["dw3_b"], p["pw3_w"], p["pw3_b"])
    ws, bs = fold(p["dws_w"], p["dws_b"], p["pws_w"], p["pws_b"])

    # 3x3 taps (9,1,Cmid) + bias (1,Cmid) packed as (Cmid, 10)
    dw2 = jnp.concatenate([p["dw2_w"][:, 0, :], p["dw2_b"]], axis=0).T.astype(jnp.float32)
    w2 = p["pw2_w"].T.astype(jnp.float32)                 # (Cmid, Cmid)
    b2 = p["pw2_b"].T.astype(jnp.float32)                 # (Cmid, 1)

    return (w1, b1, dw2, w2, b2, w3, b3, ws, bs)


def conv_block_pallas(x_nchw, params, *, images_per_block=1):
    N, Cin, H, W = x_nchw.shape
    Cout = params["pw3_w"].shape[1]
    HW = H * W

    x = x_nchw.reshape(N, Cin, HW)                        # NCHW-native, free reshape
    kparams = _prepare_kernel_params(params)

    B = images_per_block if (images_per_block > 0 and N % images_per_block == 0) else 1

    def _param_spec(p):
        nd = p.ndim
        return pl.BlockSpec(p.shape, lambda n, _nd=nd: (0,) * _nd)

    in_specs = [pl.BlockSpec((B, Cin, HW), lambda n: (n, 0, 0))]
    in_specs += [_param_spec(p) for p in kparams]

    out = pl.pallas_call(
        functools.partial(_convblock_kernel, H, W),
        out_shape=jax.ShapeDtypeStruct((N, Cout, HW), jnp.float32),
        grid=(N // B,),
        in_specs=in_specs,
        out_specs=pl.BlockSpec((B, Cout, HW), lambda n: (n, 0, 0)),
        compiler_params=pltpu.CompilerParams(dimension_semantics=("parallel",)),
    )(x, *kparams)

    return out.reshape(N, Cout, H, W)                     # free reshape back to NCHW


# --------------------------------------------------------------------------- params / reference

def init_params(key, cin, cmid, cout):
    """Deterministic synthetic parameters (shapes follow the PyTorch module)."""
    ks = jax.random.split(key, 16)

    def nrm(k, shape, scale):
        return (scale * jax.random.normal(k, shape)).astype(jnp.float32)

    return {
        # depthwise 1x1 convs == per-channel scale + bias
        "dw1_w": 1.0 + nrm(ks[0], (1, cin), 0.1),   "dw1_b": nrm(ks[1], (1, cin), 0.1),
        "pw1_w": nrm(ks[2], (cin, cmid), 0.3),      "pw1_b": nrm(ks[3], (1, cmid), 0.1),
        # depthwise 3x3: 9 taps stored as (9, 1, C)
        "dw2_w": nrm(ks[4], (9, 1, cmid), 0.3),     "dw2_b": nrm(ks[5], (1, cmid), 0.1),
        "pw2_w": nrm(ks[6], (cmid, cmid), 0.3),     "pw2_b": nrm(ks[7], (1, cmid), 0.1),
        "dw3_w": 1.0 + nrm(ks[8], (1, cmid), 0.1),  "dw3_b": nrm(ks[9], (1, cmid), 0.1),
        "pw3_w": nrm(ks[10], (cmid, cout), 0.3),    "pw3_b": nrm(ks[11], (1, cout), 0.1),
        "dws_w": 1.0 + nrm(ks[12], (1, cin), 0.1),  "dws_b": nrm(ks[13], (1, cin), 0.1),
        "pws_w": nrm(ks[14], (cin, cout), 0.3),     "pws_b": nrm(ks[15], (1, cout), 0.1),
    }


def conv_block_reference(x, p):
    """Pure-JAX NCHW reference matching PyTorch ConvBlock semantics."""
    def inorm_relu(t):
        m = t.mean(axis=(2, 3), keepdims=True)
        v = ((t - m) ** 2).mean(axis=(2, 3), keepdims=True)
        return jnp.maximum((t - m) / jnp.sqrt(v + EPS), 0.0)

    def dw1x1(t, w, b):                 # w, b: (1, C)
        return t * w[0, :, None, None] + b[0, :, None, None]

    def pw1x1(t, w, b):                 # w: (Cin, Cout), b: (1, Cout)
        y = jnp.einsum("nchw,cd->ndhw", t, w, precision=_REF_PREC)
        return y + b[0, :, None, None]

    def dw3x3(t, w, b):                 # w: (9, 1, C), b: (1, C)
        n, c, h_, w_ = t.shape
        pad = jnp.pad(t, ((0, 0), (0, 0), (1, 1), (1, 1)))
        acc = jnp.zeros_like(t)
        for i in range(3):
            for j in range(3):
                tap = w[i * 3 + j, 0][:, None, None]
                acc = acc + pad[:, :, i:i + h_, j:j + w_] * tap
        return acc + b[0, :, None, None]

    out = inorm_relu(pw1x1(dw1x1(x, p["dw1_w"], p["dw1_b"]), p["pw1_w"], p["pw1_b"]))
    out = inorm_relu(pw1x1(dw3x3(out, p["dw2_w"], p["dw2_b"]), p["pw2_w"], p["pw2_b"]))
    out = inorm_relu(pw1x1(dw1x1(out, p["dw3_w"], p["dw3_b"]), p["pw3_w"], p["pw3_b"]))
    short = inorm_relu(pw1x1(dw1x1(x, p["dws_w"], p["dws_b"]), p["pws_w"], p["pws_b"]))
    return out + short


if __name__ == "__main__":
    key = jax.random.PRNGKey(0)
    kx, kp = jax.random.split(key)

    N, Cin, Cmid, Cout, H, W = 2, 4, 8, 8, 16, 16
    x = jax.random.normal(kx, (N, Cin, H, W), dtype=jnp.float32)
    params = init_params(kp, Cin, Cmid, Cout)

    out = jax.block_until_ready(conv_block_pallas(x, params))
    assert out.shape == (N, Cout, H, W)

    ref = conv_block_reference(x, params)
    if not jnp.allclose(out, ref, atol=1e-3, rtol=1e-3):
        max_err = float(jnp.max(jnp.abs(out - ref)))
        raise AssertionError(f"Pallas kernel mismatch vs reference, max abs err = {max_err}")

    print("KERNEL_OK")
</pallas_src>

<mosaic_0001>
module attributes {stable_mosaic.version = 11 : i64} {
  func.func @_convblock_kernel(%arg0: i32, %arg1: memref<1x4x256xf32, #tpu.memory_space<vmem>>, %arg2: memref<8x4xf32, #tpu.memory_space<vmem>>, %arg3: memref<8x1xf32, #tpu.memory_space<vmem>>, %arg4: memref<8x10xf32, #tpu.memory_space<vmem>>, %arg5: memref<8x8xf32, #tpu.memory_space<vmem>>, %arg6: memref<8x1xf32, #tpu.memory_space<vmem>>, %arg7: memref<8x8xf32, #tpu.memory_space<vmem>>, %arg8: memref<8x1xf32, #tpu.memory_space<vmem>>, %arg9: memref<8x4xf32, #tpu.memory_space<vmem>>, %arg10: memref<8x1xf32, #tpu.memory_space<vmem>>, %arg11: memref<1x8x256xf32, #tpu.memory_space<vmem>>) attributes {dimension_semantics = [#tpu.dimension_semantics<parallel>], iteration_bounds = array<i64: 2>, scalar_prefetch = 0 : i64, scratch_operands = 0 : i64, tpu.core_type = #tpu.core_type<tc>, window_params = [{transform_indices = @transform_0, window_bounds = array<i64: 1, 4, 256>}, {pipeline_mode = #tpu.pipeline_mode<synchronous>, transform_indices = @transform_1, window_bounds = array<i64: 8, 4>}, {pipeline_mode = #tpu.pipeline_mode<synchronous>, transform_indices = @transform_2, window_bounds = array<i64: 8, 1>}, {pipeline_mode = #tpu.pipeline_mode<synchronous>, transform_indices = @transform_3, window_bounds = array<i64: 8, 10>}, {pipeline_mode = #tpu.pipeline_mode<synchronous>, transform_indices = @transform_4, window_bounds = array<i64: 8, 8>}, {pipeline_mode = #tpu.pipeline_mode<synchronous>, transform_indices = @transform_5, window_bounds = array<i64: 8, 1>}, {pipeline_mode = #tpu.pipeline_mode<synchronous>, transform_indices = @transform_6, window_bounds = array<i64: 8, 8>}, {pipeline_mode = #tpu.pipeline_mode<synchronous>, transform_indices = @transform_7, window_bounds = array<i64: 8, 1>}, {pipeline_mode = #tpu.pipeline_mode<synchronous>, transform_indices = @transform_8, window_bounds = array<i64: 8, 4>}, {pipeline_mode = #tpu.pipeline_mode<synchronous>, transform_indices = @transform_9, window_bounds = array<i64: 8, 1>}, {transform_indices = @transform_10, window_bounds = array<i64: 1, 8, 256>}]} {
    %c0 = arith.constant 0 : index
    %c0_0 = arith.constant 0 : index
    %c0_1 = arith.constant 0 : index
    %0 = vector.load %arg1[%c0, %c0_0, %c0_1] : memref<1x4x256xf32, #tpu.memory_space<vmem>>, vector<1x4x256xf32>
    %1 = vector.shape_cast %0 : vector<1x4x256xf32> to vector<4x256xf32>
    %c0_2 = arith.constant 0 : index
    %c0_3 = arith.constant 0 : index
    %2 = vector.load %arg2[%c0_2, %c0_3] : memref<8x4xf32, #tpu.memory_space<vmem>>, vector<8x4xf32>
    %c0_4 = arith.constant 0 : index
    %c0_5 = arith.constant 0 : index
    %3 = vector.load %arg3[%c0_4, %c0_5] : memref<8x1xf32, #tpu.memory_space<vmem>>, vector<8x1xf32>
    %4 = vector.shape_cast %3 : vector<8x1xf32> to vector<8x1xf32>
    %5 = vector.broadcast %4 : vector<8x1xf32> to vector<8x256xf32>
    %6 = vector.extract_strided_slice %2 {offsets = [0, 0], sizes = [8, 1], strides = [1, 1]} : vector<8x4xf32> to vector<8x1xf32>
    %7 = vector.extract_strided_slice %1 {offsets = [0, 0], sizes = [1, 256], strides = [1, 1]} : vector<4x256xf32> to vector<1x256xf32>
    %8 = vector.broadcast %6 : vector<8x1xf32> to vector<8x256xf32>
    %9 = vector.broadcast %7 : vector<1x256xf32> to vector<8x256xf32>
    %10 = arith.mulf %8, %9 : vector<8x256xf32>
    %11 = arith.addf %5, %10 : vector<8x256xf32>
    %12 = vector.extract_strided_slice %2 {offsets = [0, 1], sizes = [8, 1], strides = [1, 1]} : vector<8x4xf32> to vector<8x1xf32>
    %13 = vector.extract_strided_slice %1 {offsets = [1, 0], sizes = [1, 256], strides = [1, 1]} : vector<4x256xf32> to vector<1x256xf32>
    %14 = vector.broadcast %12 : vector<8x1xf32> to vector<8x256xf32>
    %15 = vector.broadcast %13 : vector<1x256xf32> to vector<8x256xf32>
    %16 = arith.mulf %14, %15 : vector<8x256xf32>
    %17 = arith.addf %11, %16 : vector<8x256xf32>
    %18 = vector.extract_strided_slice %2 {offsets = [0, 2], sizes = [8, 1], strides = [1, 1]} : vector<8x4xf32> to vector<8x1xf32>
    %19 = vector.extract_strided_slice %1 {offsets = [2, 0], sizes = [1, 256], strides = [1, 1]} : vector<4x256xf32> to vector<1x256xf32>
    %20 = vector.broadcast %18 : vector<8x1xf32> to vector<8x256xf32>
    %21 = vector.broadcast %19 : vector<1x256xf32> to vector<8x256xf32>
    %22 = arith.mulf %20, %21 : vector<8x256xf32>
    %23 = arith.addf %17, %22 : vector<8x256xf32>
    %24 = vector.extract_strided_slice %2 {offsets = [0, 3], sizes = [8, 1], strides = [1, 1]} : vector<8x4xf32> to vector<8x1xf32>
    %25 = vector.extract_strided_slice %1 {offsets = [3, 0], sizes = [1, 256], strides = [1, 1]} : vector<4x256xf32> to vector<1x256xf32>
    %26 = vector.broadcast %24 : vector<8x1xf32> to vector<8x256xf32>
    %27 = vector.broadcast %25 : vector<1x256xf32> to vector<8x256xf32>
    %28 = arith.mulf %26, %27 : vector<8x256xf32>
    %29 = arith.addf %23, %28 : vector<8x256xf32>
    %cst = arith.constant dense<0.000000e+00> : vector<8xf32>
    %30 = vector.multi_reduction <add>, %29, %cst [1] : vector<8x256xf32> to vector<8xf32>
    %31 = vector.shape_cast %30 : vector<8xf32> to vector<8x1xf32>
    %32 = arith.mulf %29, %29 : vector<8x256xf32>
    %cst_6 = arith.constant dense<0.000000e+00> : vector<8xf32>
    %33 = vector.multi_reduction <add>, %32, %cst_6 [1] : vector<8x256xf32> to vector<8xf32>
    %34 = vector.shape_cast %33 : vector<8xf32> to vector<8x1xf32>
    %cst_7 = arith.constant 3.906250e-03 : f32
    %35 = vector.broadcast %cst_7 : f32 to vector<8x1xf32>
    %36 = arith.mulf %31, %35 : vector<8x1xf32>
    %cst_8 = arith.constant 3.906250e-03 : f32
    %37 = vector.broadcast %cst_8 : f32 to vector<8x1xf32>
    %38 = arith.mulf %34, %37 : vector<8x1xf32>
    %39 = arith.mulf %36, %36 : vector<8x1xf32>
    %40 = arith.subf %38, %39 : vector<8x1xf32>
    %cst_9 = arith.constant 0.000000e+00 : f32
    %41 = vector.broadcast %cst_9 : f32 to vector<8x1xf32>
    %42 = arith.maximumf %40, %41 : vector<8x1xf32>
    %43 = vector.broadcast %36 : vector<8x1xf32> to vector<8x256xf32>
    %44 = arith.subf %29, %43 : vector<8x256xf32>
    %cst_10 = arith.constant 9.99999974E-6 : f32
    %45 = vector.broadcast %cst_10 : f32 to vector<8x1xf32>
    %46 = arith.addf %42, %45 : vector<8x1xf32>
    %47 = math.rsqrt %46 : vector<8x1xf32>
    %48 = vector.broadcast %47 : vector<8x1xf32> to vector<8x256xf32>
    %49 = arith.mulf %44, %48 : vector<8x256xf32>
    %cst_11 = arith.constant 0.000000e+00 : f32
    %50 = vector.broadcast %cst_11 : f32 to vector<8x256xf32>
    %51 = arith.maximumf %49, %50 : vector<8x256xf32>
    %c0_12 = arith.constant 0 : index
    %c0_13 = arith.constant 0 : index
    %52 = vector.load %arg4[%c0_12, %c0_13] : memref<8x10xf32, #tpu.memory_space<vmem>>, vector<8x10xf32>
    %53 = tpu.iota {dimensions = array<i32: 1>} : vector<1x256xi32>
    %c16_i32 = arith.constant 16 : i32
    %c0_i32 = arith.constant 0 : i32
    %54 = arith.cmpi eq, %c16_i32, %c0_i32 : i32
    %c1_i32 = arith.constant 1 : i32
    %55 = arith.select %54, %c1_i32, %c16_i32 : i32
    %56 = vector.broadcast %55 : i32 to vector<1x256xi32>
    %57 = arith.remsi %53, %56 : vector<1x256xi32>
    %c0_i32_14 = arith.constant 0 : i32
    %58 = vector.broadcast %c0_i32_14 : i32 to vector<1x256xi32>
    %59 = arith.cmpi ne, %57, %58 : vector<1x256xi32>
    %c0_i32_15 = arith.constant 0 : i32
    %60 = vector.broadcast %c0_i32_15 : i32 to vector<1x256xi32>
    %61 = arith.cmpi slt, %57, %60 : vector<1x256xi32>
    %c0_i32_16 = arith.constant 0 : i32
    %62 = arith.cmpi slt, %55, %c0_i32_16 : i32
    %63 = vector.broadcast %62 : i1 to vector<1x256xi1>
    %64 = vector.broadcast %63 : vector<1x256xi1> to vector<1x256xi1>
    %65 = arith.xori %61, %64 : vector<1x256xi1>
    %66 = arith.andi %65, %59 : vector<1x256xi1>
    %67 = vector.broadcast %55 : i32 to vector<1x256xi32>
    %68 = arith.addi %57, %67 : vector<1x256xi32>
    %69 = arith.select %66, %68, %57 : vector<1x256xi1>, vector<1x256xi32>
    %c16_i32_17 = arith.constant 16 : i32
    %70 = vector.broadcast %c16_i32_17 : i32 to vector<1x256xi32>
    %71 = arith.cmpi sge, %53, %70 : vector<1x256xi32>
    %c240_i32 = arith.constant 240 : i32
    %72 = vector.broadcast %c240_i32 : i32 to vector<1x256xi32>
    %73 = arith.cmpi slt, %53, %72 : vector<1x256xi32>
    %c1_i32_18 = arith.constant 1 : i32
    %74 = vector.broadcast %c1_i32_18 : i32 to vector<1x256xi32>
    %75 = arith.cmpi sge, %69, %74 : vector<1x256xi32>
    %c14_i32 = arith.constant 14 : i32
    %76 = vector.broadcast %c14_i32 : i32 to vector<1x256xi32>
    %77 = arith.cmpi sle, %69, %76 : vector<1x256xi32>
    %78 = vector.extract_strided_slice %52 {offsets = [0, 9], sizes = [8, 1], strides = [1, 1]} : vector<8x10xf32> to vector<8x1xf32>
    %79 = vector.shape_cast %78 : vector<8x1xf32> to vector<8x1xf32>
    %80 = vector.broadcast %79 : vector<8x1xf32> to vector<8x256xf32>
    %c17_i32 = arith.constant 17 : i32
    %81 = tpu.dynamic_rotate %51 by %c17_i32 dim 1 : vector<8x256xf32>, i32 -> vector<8x256xf32>
    %82 = arith.andi %71, %75 : vector<1x256xi1>
    %cst_19 = arith.constant 0.000000e+00 : f32
    %83 = vector.shape_cast %82 : vector<1x256xi1> to vector<1x256xi1>
    %84 = vector.broadcast %83 : vector<1x256xi1> to vector<8x256xi1>
    %85 = vector.broadcast %cst_19 : f32 to vector<8x256xf32>
    %86 = arith.select %84, %81, %85 : vector<8x256xi1>, vector<8x256xf32>
    %87 = vector.extract_strided_slice %52 {offsets = [0, 0], sizes = [8, 1], strides = [1, 1]} : vector<8x10xf32> to vector<8x1xf32>
    %88 = vector.broadcast %87 : vector<8x1xf32> to vector<8x256xf32>
    %89 = arith.mulf %86, %88 : vector<8x256xf32>
    %90 = arith.addf %80, %89 : vector<8x256xf32>
    %c16_i32_20 = arith.constant 16 : i32
    %91 = tpu.dynamic_rotate %51 by %c16_i32_20 dim 1 : vector<8x256xf32>, i32 -> vector<8x256xf32>
    %cst_21 = arith.constant 0.000000e+00 : f32
    %92 = vector.shape_cast %71 : vector<1x256xi1> to vector<1x256xi1>
    %93 = vector.broadcast %92 : vector<1x256xi1> to vector<8x256xi1>
    %94 = vector.broadcast %cst_21 : f32 to vector<8x256xf32>
    %95 = arith.select %93, %91, %94 : vector<8x256xi1>, vector<8x256xf32>
    %96 = vector.extract_strided_slice %52 {offsets = [0, 1], sizes = [8, 1], strides = [1, 1]} : vector<8x10xf32> to vector<8x1xf32>
    %97 = vector.broadcast %96 : vector<8x1xf32> to vector<8x256xf32>
    %98 = arith.mulf %95, %97 : vector<8x256xf32>
    %99 = arith.addf %90, %98 : vector<8x256xf32>
    %c15_i32 = arith.constant 15 : i32
    %100 = tpu.dynamic_rotate %51 by %c15_i32 dim 1 : vector<8x256xf32>, i32 -> vector<8x256xf32>
    %101 = arith.andi %71, %77 : vector<1x256xi1>
    %cst_22 = arith.constant 0.000000e+00 : f32
    %102 = vector.shape_cast %101 : vector<1x256xi1> to vector<1x256xi1>
    %103 = vector.broadcast %102 : vector<1x256xi1> to vector<8x256xi1>
    %104 = vector.broadcast %cst_22 : f32 to vector<8x256xf32>
    %105 = arith.select %103, %100, %104 : vector<8x256xi1>, vector<8x256xf32>
    %106 = vector.extract_strided_slice %52 {offsets = [0, 2], sizes = [8, 1], strides = [1, 1]} : vector<8x10xf32> to vector<8x1xf32>
    %107 = vector.broadcast %106 : vector<8x1xf32> to vector<8x256xf32>
    %108 = arith.mulf %105, %107 : vector<8x256xf32>
    %109 = arith.addf %99, %108 : vector<8x256xf32>
    %c1_i32_23 = arith.constant 1 : i32
    %110 = tpu.dynamic_rotate %51 by %c1_i32_23 dim 1 : vector<8x256xf32>, i32 -> vector<8x256xf32>
    %cst_24 = arith.constant 0.000000e+00 : f32
    %111 = vector.shape_cast %75 : vector<1x256xi1> to vector<1x256xi1>
    %112 = vector.broadcast %111 : vector<1x256xi1> to vector<8x256xi1>
    %113 = vector.broadcast %cst_24 : f32 to vector<8x256xf32>
    %114 = arith.select %112, %110, %113 : vector<8x256xi1>, vector<8x256xf32>
    %115 = vector.extract_strided_slice %52 {offsets = [0, 3], sizes = [8, 1], strides = [1, 1]} : vector<8x10xf32> to vector<8x1xf32>
    %116 = vector.broadcast %115 : vector<8x1xf32> to vector<8x256xf32>
    %117 = arith.mulf %114, %116 : vector<8x256xf32>
    %118 = arith.addf %109, %117 : vector<8x256xf32>
    %119 = vector.extract_strided_slice %52 {offsets = [0, 4], sizes = [8, 1], strides = [1, 1]} : vector<8x10xf32> to vector<8x1xf32>
    %120 = vector.broadcast %119 : vector<8x1xf32> to vector<8x256xf32>
    %121 = arith.mulf %51, %120 : vector<8x256xf32>
    %122 = arith.addf %118, %121 : vector<8x256xf32>
    %c255_i32 = arith.constant 255 : i32
    %123 = tpu.dynamic_rotate %51 by %c255_i32 dim 1 : vector<8x256xf32>, i32 -> vector<8x256xf32>
    %cst_25 = arith.constant 0.000000e+00 : f32
    %124 = vector.shape_cast %77 : vector<1x256xi1> to vector<1x256xi1>
    %125 = vector.broadcast %124 : vector<1x256xi1> to vector<8x256xi1>
    %126 = vector.broadcast %cst_25 : f32 to vector<8x256xf32>
    %127 = arith.select %125, %123, %126 : vector<8x256xi1>, vector<8x256xf32>
    %128 = vector.extract_strided_slice %52 {offsets = [0, 5], sizes = [8, 1], strides = [1, 1]} : vector<8x10xf32> to vector<8x1xf32>
    %129 = vector.broadcast %128 : vector<8x1xf32> to vector<8x256xf32>
    %130 = arith.mulf %127, %129 : vector<8x256xf32>
    %131 = arith.addf %122, %130 : vector<8x256xf32>
    %c241_i32 = arith.constant 241 : i32
    %132 = tpu.dynamic_rotate %51 by %c241_i32 dim 1 : vector<8x256xf32>, i32 -> vector<8x256xf32>
    %133 = arith.andi %73, %75 : vector<1x256xi1>
    %cst_26 = arith.constant 0.000000e+00 : f32
    %134 = vector.shape_cast %133 : vector<1x256xi1> to vector<1x256xi1>
    %135 = vector.broadcast %134 : vector<1x256xi1> to vector<8x256xi1>
    %136 = vector.broadcast %cst_26 : f32 to vector<8x256xf32>
    %137 = arith.select %135, %132, %136 : vector<8x256xi1>, vector<8x256xf32>
    %138 = vector.extract_strided_slice %52 {offsets = [0, 6], sizes = [8, 1], strides = [1, 1]} : vector<8x10xf32> to vector<8x1xf32>
    %139 = vector.broadcast %138 : vector<8x1xf32> to vector<8x256xf32>
    %140 = arith.mulf %137, %139 : vector<8x256xf32>
    %141 = arith.addf %131, %140 : vector<8x256xf32>
    %c240_i32_27 = arith.constant 240 : i32
    %142 = tpu.dynamic_rotate %51 by %c240_i32_27 dim 1 : vector<8x256xf32>, i32 -> vector<8x256xf32>
    %cst_28 = arith.constant 0.000000e+00 : f32
    %143 = vector.shape_cast %73 : vector<1x256xi1> to vector<1x256xi1>
    %144 = vector.broadcast %143 : vector<1x256xi1> to vector<8x256xi1>
    %145 = vector.broadcast %cst_28 : f32 to vector<8x256xf32>
    %146 = arith.select %144, %142, %145 : vector<8x256xi1>, vector<8x256xf32>
    %147 = vector.extract_strided_slice %52 {offsets = [0, 7], sizes = [8, 1], strides = [1, 1]} : vector<8x10xf32> to vector<8x1xf32>
    %148 = vector.broadcast %147 : vector<8x1xf32> to vector<8x256xf32>
    %149 = arith.mulf %146, %148 : vector<8x256xf32>
    %150 = arith.addf %141, %149 : vector<8x256xf32>
    %c239_i32 = arith.constant 239 : i32
    %151 = tpu.dynamic_rotate %51 by %c239_i32 dim 1 : vector<8x256xf32>, i32 -> vector<8x256xf32>
    %152 = arith.andi %73, %77 : vector<1x256xi1>
    %cst_29 = arith.constant 0.000000e+00 : f32
    %153 = vector.shape_cast %152 : vector<1x256xi1> to vector<1x256xi1>
    %154 = vector.broadcast %153 : vector<1x256xi1> to vector<8x256xi1>
    %155 = vector.broadcast %cst_29 : f32 to vector<8x256xf32>
    %156 = arith.select %154, %151, %155 : vector<8x256xi1>, vector<8x256xf32>
    %157 = vector.extract_strided_slice %52 {offsets = [0, 8], sizes = [8, 1], strides = [1, 1]} : vector<8x10xf32> to vector<8x1xf32>
    %158 = vector.broadcast %157 : vector<8x1xf32> to vector<8x256xf32>
    %159 = arith.mulf %156, %158 : vector<8x256xf32>
    %160 = arith.addf %150, %159 : vector<8x256xf32>
    %c0_30 = arith.constant 0 : index
    %c0_31 = arith.constant 0 : index
    %161 = vector.load %arg5[%c0_30, %c0_31] : memref<8x8xf32, #tpu.memory_space<vmem>>, vector<8x8xf32>
    %c0_32 = arith.constant 0 : index
    %c0_33 = arith.constant 0 : index
    %162 = vector.load %arg6[%c0_32, %c0_33] : memref<8x1xf32, #tpu.memory_space<vmem>>, vector<8x1xf32>
    %163 = vector.shape_cast %162 : vector<8x1xf32> to vector<8x1xf32>
    %164 = vector.broadcast %163 : vector<8x1xf32> to vector<8x256xf32>
    %165 = vector.extract_strided_slice %161 {offsets = [0, 0], sizes = [8, 1], strides = [1, 1]} : vector<8x8xf32> to vector<8x1xf32>
    %166 = vector.extract_strided_slice %160 {offsets = [0, 0], sizes = [1, 256], strides = [1, 1]} : vector<8x256xf32> to vector<1x256xf32>
    %167 = vector.broadcast %165 : vector<8x1xf32> to vector<8x256xf32>
    %168 = vector.broadcast %166 : vector<1x256xf32> to vector<8x256xf32>
    %169 = arith.mulf %167, %168 : vector<8x256xf32>
    %170 = arith.addf %164, %169 : vector<8x256xf32>
    %171 = vector.extract_strided_slice %161 {offsets = [0, 1], sizes = [8, 1], strides = [1, 1]} : vector<8x8xf32> to vector<8x1xf32>
    %172 = vector.extract_strided_slice %160 {offsets = [1, 0], sizes = [1, 256], strides = [1, 1]} : vector<8x256xf32> to vector<1x256xf32>
    %173 = vector.broadcast %171 : vector<8x1xf32> to vector<8x256xf32>
    %174 = vector.broadcast %172 : vector<1x256xf32> to vector<8x256xf32>
    %175 = arith.mulf %173, %174 : vector<8x256xf32>
    %176 = arith.addf %170, %175 : vector<8x256xf32>
    %177 = vector.extract_strided_slice %161 {offsets = [0, 2], sizes = [8, 1], strides = [1, 1]} : vector<8x8xf32> to vector<8x1xf32>
    %178 = vector.extract_strided_slice %160 {offsets = [2, 0], sizes = [1, 256], strides = [1, 1]} : vector<8x256xf32> to vector<1x256xf32>
    %179 = vector.broadcast %177 : vector<8x1xf32> to vector<8x256xf32>
    %180 = vector.broadcast %178 : vector<1x256xf32> to vector<8x256xf32>
    %181 = arith.mulf %179, %180 : vector<8x256xf32>
    %182 = arith.addf %176, %181 : vector<8x256xf32>
    %183 = vector.extract_strided_slice %161 {offsets = [0, 3], sizes = [8, 1], strides = [1, 1]} : vector<8x8xf32> to vector<8x1xf32>
    %184 = vector.extract_strided_slice %160 {offsets = [3, 0], sizes = [1, 256], strides = [1, 1]} : vector<8x256xf32> to vector<1x256xf32>
    %185 = vector.broadcast %183 : vector<8x1xf32> to vector<8x256xf32>
    %186 = vector.broadcast %184 : vector<1x256xf32> to vector<8x256xf32>
    %187 = arith.mulf %185, %186 : vector<8x256xf32>
    %188 = arith.addf %182, %187 : vector<8x256xf32>
    %189 = vector.extract_strided_slice %161 {offsets = [0, 4], sizes = [8, 1], strides = [1, 1]} : vector<8x8xf32> to vector<8x1xf32>
    %190 = vector.extract_strided_slice %160 {offsets = [4, 0], sizes = [1, 256], strides = [1, 1]} : vector<8x256xf32> to vector<1x256xf32>
    %191 = vector.broadcast %189 : vector<8x1xf32> to vector<8x256xf32>
    %192 = vector.broadcast %190 : vector<1x256xf32> to vector<8x256xf32>
    %193 = arith.mulf %191, %192 : vector<8x256xf32>
    %194 = arith.addf %188, %193 : vector<8x256xf32>
    %195 = vector.extract_strided_slice %161 {offsets = [0, 5], sizes = [8, 1], strides = [1, 1]} : vector<8x8xf32> to vector<8x1xf32>
    %196 = vector.extract_strided_slice %160 {offsets = [5, 0], sizes = [1, 256], strides = [1, 1]} : vector<8x256xf32> to vector<1x256xf32>
    %197 = vector.broadcast %195 : vector<8x1xf32> to vector<8x256xf32>
    %198 = vector.broadcast %196 : vector<1x256xf32> to vector<8x256xf32>
    %199 = arith.mulf %197, %198 : vector<8x256xf32>
    %200 = arith.addf %194, %199 : vector<8x256xf32>
    %201 = vector.extract_strided_slice %161 {offsets = [0, 6], sizes = [8, 1], strides = [1, 1]} : vector<8x8xf32> to vector<8x1xf32>
    %202 = vector.extract_strided_slice %160 {offsets = [6, 0], sizes = [1, 256], strides = [1, 1]} : vector<8x256xf32> to vector<1x256xf32>
    %203 = vector.broadcast %201 : vector<8x1xf32> to vector<8x256xf32>
    %204 = vector.broadcast %202 : vector<1x256xf32> to vector<8x256xf32>
    %205 = arith.mulf %203, %204 : vector<8x256xf32>
    %206 = arith.addf %200, %205 : vector<8x256xf32>
    %207 = vector.extract_strided_slice %161 {offsets = [0, 7], sizes = [8, 1], strides = [1, 1]} : vector<8x8xf32> to vector<8x1xf32>
    %208 = vector.extract_strided_slice %160 {offsets = [7, 0], sizes = [1, 256], strides = [1, 1]} : vector<8x256xf32> to vector<1x256xf32>
    %209 = vector.broadcast %207 : vector<8x1xf32> to vector<8x256xf32>
    %210 = vector.broadcast %208 : vector<1x256xf32> to vector<8x256xf32>
    %211 = arith.mulf %209, %210 : vector<8x256xf32>
    %212 = arith.addf %206, %211 : vector<8x256xf32>
    %cst_34 = arith.constant dense<0.000000e+00> : vector<8xf32>
    %213 = vector.multi_reduction <add>, %212, %cst_34 [1] : vector<8x256xf32> to vector<8xf32>
    %214 = vector.shape_cast %213 : vector<8xf32> to vector<8x1xf32>
    %215 = arith.mulf %212, %212 : vector<8x256xf32>
    %cst_35 = arith.constant dense<0.000000e+00> : vector<8xf32>
    %216 = vector.multi_reduction <add>, %215, %cst_35 [1] : vector<8x256xf32> to vector<8xf32>
    %217 = vector.shape_cast %216 : vector<8xf32> to vector<8x1xf32>
    %cst_36 = arith.constant 3.906250e-03 : f32
    %218 = vector.broadcast %cst_36 : f32 to vector<8x1xf32>
    %219 = arith.mulf %214, %218 : vector<8x1xf32>
    %cst_37 = arith.constant 3.906250e-03 : f32
    %220 = vector.broadcast %cst_37 : f32 to vector<8x1xf32>
    %221 = arith.mulf %217, %220 : vector<8x1xf32>
    %222 = arith.mulf %219, %219 : vector<8x1xf32>
    %223 = arith.subf %221, %222 : vector<8x1xf32>
    %cst_38 = arith.constant 0.000000e+00 : f32
    %224 = vector.broadcast %cst_38 : f32 to vector<8x1xf32>
    %225 = arith.maximumf %223, %224 : vector<8x1xf32>
    %226 = vector.broadcast %219 : vector<8x1xf32> to vector<8x256xf32>
    %227 = arith.subf %212, %226 : vector<8x256xf32>
    %cst_39 = arith.constant 9.99999974E-6 : f32
    %228 = vector.broadcast %cst_39 : f32 to vector<8x1xf32>
    %229 = arith.addf %225, %228 : vector<8x1xf32>
    %230 = math.rsqrt %229 : vector<8x1xf32>
    %231 = vector.broadcast %230 : vector<8x1xf32> to vector<8x256xf32>
    %232 = arith.mulf %227, %231 : vector<8x256xf32>
    %cst_40 = arith.constant 0.000000e+00 : f32
    %233 = vector.broadcast %cst_40 : f32 to vector<8x256xf32>
    %234 = arith.maximumf %232, %233 : vector<8x256xf32>
    %c0_41 = arith.constant 0 : index
    %c0_42 = arith.constant 0 : index
    %235 = vector.load %arg7[%c0_41, %c0_42] : memref<8x8xf32, #tpu.memory_space<vmem>>, vector<8x8xf32>
    %c0_43 = arith.constant 0 : index
    %c0_44 = arith.constant 0 : index
    %236 = vector.load %arg8[%c0_43, %c0_44] : memref<8x1xf32, #tpu.memory_space<vmem>>, vector<8x1xf32>
    %237 = vector.shape_cast %236 : vector<8x1xf32> to vector<8x1xf32>
    %238 = vector.broadcast %237 : vector<8x1xf32> to vector<8x256xf32>
    %239 = vector.extract_strided_slice %235 {offsets = [0, 0], sizes = [8, 1], strides = [1, 1]} : vector<8x8xf32> to vector<8x1xf32>
    %240 = vector.extract_strided_slice %234 {offsets = [0, 0], sizes = [1, 256], strides = [1, 1]} : vector<8x256xf32> to vector<1x256xf32>
    %241 = vector.broadcast %239 : vector<8x1xf32> to vector<8x256xf32>
    %242 = vector.broadcast %240 : vector<1x256xf32> to vector<8x256xf32>
    %243 = arith.mulf %241, %242 : vector<8x256xf32>
    %244 = arith.addf %238, %243 : vector<8x256xf32>
    %245 = vector.extract_strided_slice %235 {offsets = [0, 1], sizes = [8, 1], strides = [1, 1]} : vector<8x8xf32> to vector<8x1xf32>
    %246 = vector.extract_strided_slice %234 {offsets = [1, 0], sizes = [1, 256], strides = [1, 1]} : vector<8x256xf32> to vector<1x256xf32>
    %247 = vector.broadcast %245 : vector<8x1xf32> to vector<8x256xf32>
    %248 = vector.broadcast %246 : vector<1x256xf32> to vector<8x256xf32>
    %249 = arith.mulf %247, %248 : vector<8x256xf32>
    %250 = arith.addf %244, %249 : vector<8x256xf32>
    %251 = vector.extract_strided_slice %235 {offsets = [0, 2], sizes = [8, 1], strides = [1, 1]} : vector<8x8xf32> to vector<8x1xf32>
    %252 = vector.extract_strided_slice %234 {offsets = [2, 0], sizes = [1, 256], strides = [1, 1]} : vector<8x256xf32> to vector<1x256xf32>
    %253 = vector.broadcast %251 : vector<8x1xf32> to vector<8x256xf32>
    %254 = vector.broadcast %252 : vector<1x256xf32> to vector<8x256xf32>
    %255 = arith.mulf %253, %254 : vector<8x256xf32>
    %256 = arith.addf %250, %255 : vector<8x256xf32>
    %257 = vector.extract_strided_slice %235 {offsets = [0, 3], sizes = [8, 1], strides = [1, 1]} : vector<8x8xf32> to vector<8x1xf32>
    %258 = vector.extract_strided_slice %234 {offsets = [3, 0], sizes = [1, 256], strides = [1, 1]} : vector<8x256xf32> to vector<1x256xf32>
    %259 = vector.broadcast %257 : vector<8x1xf32> to vector<8x256xf32>
    %260 = vector.broadcast %258 : vector<1x256xf32> to vector<8x256xf32>
    %261 = arith.mulf %259, %260 : vector<8x256xf32>
    %262 = arith.addf %256, %261 : vector<8x256xf32>
    %263 = vector.extract_strided_slice %235 {offsets = [0, 4], sizes = [8, 1], strides = [1, 1]} : vector<8x8xf32> to vector<8x1xf32>
    %264 = vector.extract_strided_slice %234 {offsets = [4, 0], sizes = [1, 256], strides = [1, 1]} : vector<8x256xf32> to vector<1x256xf32>
    %265 = vector.broadcast %263 : vector<8x1xf32> to vector<8x256xf32>
    %266 = vector.broadcast %264 : vector<1x256xf32> to vector<8x256xf32>
    %267 = arith.mulf %265, %266 : vector<8x256xf32>
    %268 = arith.addf %262, %267 : vector<8x256xf32>
    %269 = vector.extract_strided_slice %235 {offsets = [0, 5], sizes = [8, 1], strides = [1, 1]} : vector<8x8xf32> to vector<8x1xf32>
    %270 = vector.extract_strided_slice %234 {offsets = [5, 0], sizes = [1, 256], strides = [1, 1]} : vector<8x256xf32> to vector<1x256xf32>
    %271 = vector.broadcast %269 : vector<8x1xf32> to vector<8x256xf32>
    %272 = vector.broadcast %270 : vector<1x256xf32> to vector<8x256xf32>
    %273 = arith.mulf %271, %272 : vector<8x256xf32>
    %274 = arith.addf %268, %273 : vector<8x256xf32>
    %275 = vector.extract_strided_slice %235 {offsets = [0, 6], sizes = [8, 1], strides = [1, 1]} : vector<8x8xf32> to vector<8x1xf32>
    %276 = vector.extract_strided_slice %234 {offsets = [6, 0], sizes = [1, 256], strides = [1, 1]} : vector<8x256xf32> to vector<1x256xf32>
    %277 = vector.broadcast %275 : vector<8x1xf32> to vector<8x256xf32>
    %278 = vector.broadcast %276 : vector<1x256xf32> to vector<8x256xf32>
    %279 = arith.mulf %277, %278 : vector<8x256xf32>
    %280 = arith.addf %274, %279 : vector<8x256xf32>
    %281 = vector.extract_strided_slice %235 {offsets = [0, 7], sizes = [8, 1], strides = [1, 1]} : vector<8x8xf32> to vector<8x1xf32>
    %282 = vector.extract_strided_slice %234 {offsets = [7, 0], sizes = [1, 256], strides = [1, 1]} : vector<8x256xf32> to vector<1x256xf32>
    %283 = vector.broadcast %281 : vector<8x1xf32> to vector<8x256xf32>
    %284 = vector.broadcast %282 : vector<1x256xf32> to vector<8x256xf32>
    %285 = arith.mulf %283, %284 : vector<8x256xf32>
    %286 = arith.addf %280, %285 : vector<8x256xf32>
    %cst_45 = arith.constant dense<0.000000e+00> : vector<8xf32>
    %287 = vector.multi_reduction <add>, %286, %cst_45 [1] : vector<8x256xf32> to vector<8xf32>
    %288 = vector.shape_cast %287 : vector<8xf32> to vector<8x1xf32>
    %289 = arith.mulf %286, %286 : vector<8x256xf32>
    %cst_46 = arith.constant dense<0.000000e+00> : vector<8xf32>
    %290 = vector.multi_reduction <add>, %289, %cst_46 [1] : vector<8x256xf32> to vector<8xf32>
    %291 = vector.shape_cast %290 : vector<8xf32> to vector<8x1xf32>
    %cst_47 = arith.constant 3.906250e-03 : f32
    %292 = vector.broadcast %cst_47 : f32 to vector<8x1xf32>
    %293 = arith.mulf %288, %292 : vector<8x1xf32>
    %cst_48 = arith.constant 3.906250e-03 : f32
    %294 = vector.broadcast %cst_48 : f32 to vector<8x1xf32>
    %295 = arith.mulf %291, %294 : vector<8x1xf32>
    %296 = arith.mulf %293, %293 : vector<8x1xf32>
    %297 = arith.subf %295, %296 : vector<8x1xf32>
    %cst_49 = arith.constant 0.000000e+00 : f32
    %298 = vector.broadcast %cst_49 : f32 to vector<8x1xf32>
    %299 = arith.maximumf %297, %298 : vector<8x1xf32>
    %300 = vector.broadcast %293 : vector<8x1xf32> to vector<8x256xf32>
    %301 = arith.subf %286, %300 : vector<8x256xf32>
    %cst_50 = arith.constant 9.99999974E-6 : f32
    %302 = vector.broadcast %cst_50 : f32 to vector<8x1xf32>
    %303 = arith.addf %299, %302 : vector<8x1xf32>
    %304 = math.rsqrt %303 : vector<8x1xf32>
    %305 = vector.broadcast %304 : vector<8x1xf32> to vector<8x256xf32>
    %306 = arith.mulf %301, %305 : vector<8x256xf32>
    %cst_51 = arith.constant 0.000000e+00 : f32
    %307 = vector.broadcast %cst_51 : f32 to vector<8x256xf32>
    %308 = arith.maximumf %306, %307 : vector<8x256xf32>
    %c0_52 = arith.constant 0 : index
    %c0_53 = arith.constant 0 : index
    %309 = vector.load %arg9[%c0_52, %c0_53] : memref<8x4xf32, #tpu.memory_space<vmem>>, vector<8x4xf32>
    %c0_54 = arith.constant 0 : index
    %c0_55 = arith.constant 0 : index
    %310 = vector.load %arg10[%c0_54, %c0_55] : memref<8x1xf32, #tpu.memory_space<vmem>>, vector<8x1xf32>
    %311 = vector.shape_cast %310 : vector<8x1xf32> to vector<8x1xf32>
    %312 = vector.broadcast %311 : vector<8x1xf32> to vector<8x256xf32>
    %313 = vector.extract_strided_slice %309 {offsets = [0, 0], sizes = [8, 1], strides = [1, 1]} : vector<8x4xf32> to vector<8x1xf32>
    %314 = vector.extract_strided_slice %1 {offsets = [0, 0], sizes = [1, 256], strides = [1, 1]} : vector<4x256xf32> to vector<1x256xf32>
    %315 = vector.broadcast %313 : vector<8x1xf32> to vector<8x256xf32>
    %316 = vector.broadcast %314 : vector<1x256xf32> to vector<8x256xf32>
    %317 = arith.mulf %315, %316 : vector<8x256xf32>
    %318 = arith.addf %312, %317 : vector<8x256xf32>
    %319 = vector.extract_strided_slice %309 {offsets = [0, 1], sizes = [8, 1], strides = [1, 1]} : vector<8x4xf32> to vector<8x1xf32>
    %320 = vector.extract_strided_slice %1 {offsets = [1, 0], sizes = [1, 256], strides = [1, 1]} : vector<4x256xf32> to vector<1x256xf32>
    %321 = vector.broadcast %319 : vector<8x1xf32> to vector<8x256xf32>
    %322 = vector.broadcast %320 : vector<1x256xf32> to vector<8x256xf32>
    %323 = arith.mulf %321, %322 : vector<8x256xf32>
    %324 = arith.addf %318, %323 : vector<8x256xf32>
    %325 = vector.extract_strided_slice %309 {offsets = [0, 2], sizes = [8, 1], strides = [1, 1]} : vector<8x4xf32> to vector<8x1xf32>
    %326 = vector.extract_strided_slice %1 {offsets = [2, 0], sizes = [1, 256], strides = [1, 1]} : vector<4x256xf32> to vector<1x256xf32>
    %327 = vector.broadcast %325 : vector<8x1xf32> to vector<8x256xf32>
    %328 = vector.broadcast %326 : vector<1x256xf32> to vector<8x256xf32>
    %329 = arith.mulf %327, %328 : vector<8x256xf32>
    %330 = arith.addf %324, %329 : vector<8x256xf32>
    %331 = vector.extract_strided_slice %309 {offsets = [0, 3], sizes = [8, 1], strides = [1, 1]} : vector<8x4xf32> to vector<8x1xf32>
    %332 = vector.extract_strided_slice %1 {offsets = [3, 0], sizes = [1, 256], strides = [1, 1]} : vector<4x256xf32> to vector<1x256xf32>
    %333 = vector.broadcast %331 : vector<8x1xf32> to vector<8x256xf32>
    %334 = vector.broadcast %332 : vector<1x256xf32> to vector<8x256xf32>
    %335 = arith.mulf %333, %334 : vector<8x256xf32>
    %336 = arith.addf %330, %335 : vector<8x256xf32>
    %cst_56 = arith.constant dense<0.000000e+00> : vector<8xf32>
    %337 = vector.multi_reduction <add>, %336, %cst_56 [1] : vector<8x256xf32> to vector<8xf32>
    %338 = vector.shape_cast %337 : vector<8xf32> to vector<8x1xf32>
    %339 = arith.mulf %336, %336 : vector<8x256xf32>
    %cst_57 = arith.constant dense<0.000000e+00> : vector<8xf32>
    %340 = vector.multi_reduction <add>, %339, %cst_57 [1] : vector<8x256xf32> to vector<8xf32>
    %341 = vector.shape_cast %340 : vector<8xf32> to vector<8x1xf32>
    %cst_58 = arith.constant 3.906250e-03 : f32
    %342 = vector.broadcast %cst_58 : f32 to vector<8x1xf32>
    %343 = arith.mulf %338, %342 : vector<8x1xf32>
    %cst_59 = arith.constant 3.906250e-03 : f32
    %344 = vector.broadcast %cst_59 : f32 to vector<8x1xf32>
    %345 = arith.mulf %341, %344 : vector<8x1xf32>
    %346 = arith.mulf %343, %343 : vector<8x1xf32>
    %347 = arith.subf %345, %346 : vector<8x1xf32>
    %cst_60 = arith.constant 0.000000e+00 : f32
    %348 = vector.broadcast %cst_60 : f32 to vector<8x1xf32>
    %349 = arith.maximumf %347, %348 : vector<8x1xf32>
    %350 = vector.broadcast %343 : vector<8x1xf32> to vector<8x256xf32>
    %351 = arith.subf %336, %350 : vector<8x256xf32>
    %cst_61 = arith.constant 9.99999974E-6 : f32
    %352 = vector.broadcast %cst_61 : f32 to vector<8x1xf32>
    %353 = arith.addf %349, %352 : vector<8x1xf32>
    %354 = math.rsqrt %353 : vector<8x1xf32>
    %355 = vector.broadcast %354 : vector<8x1xf32> to vector<8x256xf32>
    %356 = arith.mulf %351, %355 : vector<8x256xf32>
    %cst_62 = arith.constant 0.000000e+00 : f32
    %357 = vector.broadcast %cst_62 : f32 to vector<8x256xf32>
    %358 = arith.maximumf %356, %357 : vector<8x256xf32>
    %359 = arith.addf %308, %358 : vector<8x256xf32>
    %c0_63 = arith.constant 0 : index
    %c0_64 = arith.constant 0 : index
    %c0_65 = arith.constant 0 : index
    %360 = vector.load %arg11[%c0_63, %c0_64, %c0_65] : memref<1x8x256xf32, #tpu.memory_space<vmem>>, vector<1x8x256xf32>
    %361 = vector.shape_cast %360 : vector<1x8x256xf32> to vector<8x256xf32>
    %362 = vector.shape_cast %359 : vector<8x256xf32> to vector<1x8x256xf32>
    tpu.vector_store %arg11[%c0_63, %c0_64, %c0_65], %362 {strides = array<i32>} : memref<1x8x256xf32, #tpu.memory_space<vmem>>, vector<1x8x256xf32>,
    return
  }
  func.func @transform_0(%arg0: i32) -> (i32, i32, i32) {
    %c0_i32 = arith.constant 0 : i32
    %c0_i32_0 = arith.constant 0 : i32
    %c0_i32_1 = arith.constant 0 : i32
    return %arg0, %c0_i32, %c0_i32_0 : i32, i32, i32
  }
  func.func @transform_1(%arg0: i32) -> (i32, i32) {
    %c0_i32 = arith.constant 0 : i32
    %c0_i32_0 = arith.constant 0 : i32
    %c0_i32_1 = arith.constant 0 : i32
    return %c0_i32, %c0_i32_0 : i32, i32
  }
  func.func @transform_2(%arg0: i32) -> (i32, i32) {
    %c0_i32 = arith.constant 0 : i32
    %c0_i32_0 = arith.constant 0 : i32
    %c0_i32_1 = arith.constant 0 : i32
    return %c0_i32, %c0_i32_0 : i32, i32
  }
  func.func @transform_3(%arg0: i32) -> (i32, i32) {
    %c0_i32 = arith.constant 0 : i32
    %c0_i32_0 = arith.constant 0 : i32
    %c0_i32_1 = arith.constant 0 : i32
    return %c0_i32, %c0_i32_0 : i32, i32
  }
  func.func @transform_4(%arg0: i32) -> (i32, i32) {
    %c0_i32 = arith.constant 0 : i32
    %c0_i32_0 = arith.constant 0 : i32
    %c0_i32_1 = arith.constant 0 : i32
    return %c0_i32, %c0_i32_0 : i32, i32
  }
  func.func @transform_5(%arg0: i32) -> (i32, i32) {
    %c0_i32 = arith.constant 0 : i32
    %c0_i32_0 = arith.constant 0 : i32
    %c0_i32_1 = arith.constant 0 : i32
    return %c0_i32, %c0_i32_0 : i32, i32
  }
  func.func @transform_6(%arg0: i32) -> (i32, i32) {
    %c0_i32 = arith.constant 0 : i32
    %c0_i32_0 = arith.constant 0 : i32
    %c0_i32_1 = arith.constant 0 : i32
    return %c0_i32, %c0_i32_0 : i32, i32
  }
  func.func @transform_7(%arg0: i32) -> (i32, i32) {
    %c0_i32 = arith.constant 0 : i32
    %c0_i32_0 = arith.constant 0 : i32
    %c0_i32_1 = arith.constant 0 : i32
    return %c0_i32, %c0_i32_0 : i32, i32
  }
  func.func @transform_8(%arg0: i32) -> (i32, i32) {
    %c0_i32 = arith.constant 0 : i32
    %c0_i32_0 = arith.constant 0 : i32
    %c0_i32_1 = arith.constant 0 : i32
    return %c0_i32, %c0_i32_0 : i32, i32
  }
  func.func @transform_9(%arg0: i32) -> (i32, i32) {
    %c0_i32 = arith.constant 0 : i32
    %c0_i32_0 = arith.constant 0 : i32
    %c0_i32_1 = arith.constant 0 : i32
    return %c0_i32, %c0_i32_0 : i32, i32
  }
  func.func @transform_10(%arg0: i32) -> (i32, i32, i32) {
    %c0_i32 = arith.constant 0 : i32
    %c0_i32_0 = arith.constant 0 : i32
    %c0_i32_1 = arith.constant 0 : i32
    return %arg0, %c0_i32, %c0_i32_0 : i32, i32, i32
  }
}

</mosaic_0001>

<llo_original>
// kernel: tpu_custom_call.1
$region0: #{tpu_custom_call.1}
  #allocation0 [shape = 'u32[]', space=smem, size = 0x4, offset = 0x4, fixed_abs, tag = 'smem constant byte address 0x4 - core index']
  #allocation1 [shape = 'u32[144,128]{1,0:T(1,128)}', space=vmem, size = 0x12000, scoped, tag = 'internal scratch']
  %s0 = inlined_call_operand.vmem [shape: f32[2,4,256], index: 0, kind: input, shape index: {}]
  %s1 = inlined_call_operand.vmem [shape: f32[8,4], index: 1, kind: input, shape index: {}]
  %s2 = inlined_call_operand.vmem [shape: f32[8,1], index: 2, kind: input, shape index: {}]
  %s3 = inlined_call_operand.vmem [shape: f32[8,10], index: 3, kind: input, shape index: {}]
  %s4 = inlined_call_operand.vmem [shape: f32[8,8], index: 4, kind: input, shape index: {}]
  %s5 = inlined_call_operand.vmem [shape: f32[8,1], index: 5, kind: input, shape index: {}]
  %s6 = inlined_call_operand.vmem [shape: f32[8,8], index: 6, kind: input, shape index: {}]
  %s7 = inlined_call_operand.vmem [shape: f32[8,1], index: 7, kind: input, shape index: {}]
  %s8 = inlined_call_operand.vmem [shape: f32[8,4], index: 8, kind: input, shape index: {}]
  %s9 = inlined_call_operand.vmem [shape: f32[8,1], index: 9, kind: input, shape index: {}]
  %s10 = inlined_call_operand.hbm [shape: f32[2,8,256], index: 10, kind: output, shape index: {}]
  %s11 = sld [smem:[#allocation0]]
  $region73: #{tpu_custom_call.1} parent=0
    _
  %s13 = ssub.s32 1, %s11
  %s14 = scalar_select 0, %s13, %s11
  $region1: #{tpu_custom_call.1} parent=0
    #allocation2 [shape = 'u8[16384]{0}', space=vmem, size = 0x4000, scoped, tag = 'output window, operand 0']
    #allocation3 [shape = 's32[2]{0}', space=sflag, size = 0x8, scoped, tag = 'scoped memory for tpu_custom_call.1']
    %15 = vsyncpa [#allocation3], 0
    %s16 = scalar_lea.sflag [#allocation3], 1
    %17 = vsyncpa %s16, 0
    loop: start=0, step=1, limit=4
    $region2: #{tpu_custom_call.1} parent=1 // loop_pre_header
      _
    $region3: #{tpu_custom_call.1} parent=1 // loop_header
      %s19 = sphi 0, %s23
      %p20 = scmp.ge.s32.totalorder %s19, 4
      %s29 = sphi 0, %s31
      %s32 = sphi 0, %s29
      %s33 = sphi 0, %s32
      %s49 = sphi 0, %s33
      %s53 = sphi 0, %s53
      %s55 = sphi 0, %s53
      %s56 = sphi 0, %s55
      %s70 = sphi 0, %s56
      %s74 = sphi 0, %s74
      %s76 = sphi 0, %s74
      %s77 = sphi 0, %s76
      %s91 = sphi 0, %s77
      %s95 = sphi 0, %s95
      %s97 = sphi 0, %s95
      %s98 = sphi 0, %s97
      %s112 = sphi 0, %s98
      %s116 = sphi 0, %s116
      %s118 = sphi 0, %s116
      %s119 = sphi 0, %s118
      %s133 = sphi 0, %s119
      %s137 = sphi 0, %s137
      %s139 = sphi 0, %s137
      %s140 = sphi 0, %s139
      %s154 = sphi 0, %s140
      %s158 = sphi 0, %s158
      %s160 = sphi 0, %s158
      %s161 = sphi 0, %s160
      %s175 = sphi 0, %s161
      %s179 = sphi 0, %s179
      %s181 = sphi 0, %s179
      %s182 = sphi 0, %s181
      %s196 = sphi 0, %s182
      %s200 = sphi 0, %s200
      %s202 = sphi 0, %s200
      %s203 = sphi 0, %s202
      %s217 = sphi 0, %s203
      %s221 = sphi 0, %s221
      %s223 = sphi 0, %s221
      %s224 = sphi 0, %s223
      %s238 = sphi 0, %s224
      %s244 = sphi 0, %s246
      %s247 = sphi 0, %s244
      %s248 = sphi 0, %s247
      %s264 = sphi 0, %s248
    $region4: #{tpu_custom_call.1} parent=1 // loop_header_branch
      %22 = sbr.rel (%p20) target = $region8
    $region5: #{tpu_custom_call.1} parent=1 // loop_body
      %s24 = ssub.s32 %s19, 1
      %s25 = ssub.s32 %s19, 2
      %s26 = sadd.s32 %s19, 1
      %s27 = ssub.s32 %s19, %s26
      %p28 = scmp.eq.s32.totalorder %s27, 0
      %s30 = sadd.s32 %s29, 1
      %s31 = scalar_select %p28, %s29, %s30
      %p34 = pneg %p28
      %p35 = scmp.eq.s32.totalorder %s19, 1
      %p36 = por %p34, %p35
      %p37 = scmp.ne.s32.totalorder %s29, %s32
      %p38 = scmp.eq.s32.totalorder %s19, 0
      %p39 = por %p37, %p38
      %p40 = scmp.ne.s32.totalorder %s29, %s32
      %p41 = scmp.eq.s32.totalorder %s24, 1
      %p42 = por %p40, %p41
      %p43 = scmp.ne.s32.totalorder %s32, %s33
      %p44 = scmp.eq.s32.totalorder %s24, 0
      %p45 = por %p43, %p44
      %p46 = scmp.ne.s32.totalorder %s32, %s33
      %p47 = scmp.eq.s32.totalorder %s25, 1
      %p48 = por %p46, %p47
      %p50 = scmp.ne.s32.totalorder %s33, %s49
      %p51 = scmp.eq.s32.totalorder %s25, 0
      %p52 = por %p50, %p51
      %s54 = sadd.s32 %s53, 1
      %p57 = scmp.eq.s32.totalorder %s19, 1
      %p58 = scmp.ne.s32.totalorder %s53, %s55
      %p59 = scmp.eq.s32.totalorder %s19, 0
      %p60 = por %p58, %p59
      %p61 = scmp.ne.s32.totalorder %s53, %s55
      %p62 = scmp.eq.s32.totalorder %s24, 1
      %p63 = por %p61, %p62
      %p64 = scmp.ne.s32.totalorder %s55, %s56
      %p65 = scmp.eq.s32.totalorder %s24, 0
      %p66 = por %p64, %p65
      %p67 = scmp.ne.s32.totalorder %s55, %s56
      %p68 = scmp.eq.s32.totalorder %s25, 1
      %p69 = por %p67, %p68
      %p71 = scmp.ne.s32.totalorder %s56, %s70
      %p72 = scmp.eq.s32.totalorder %s25, 0
      %p73 = por %p71, %p72
      %s75 = sadd.s32 %s74, 1
      %p78 = scmp.eq.s32.totalorder %s19, 1
      %p79 = scmp.ne.s32.totalorder %s74, %s76
      %p80 = scmp.eq.s32.totalorder %s19, 0
      %p81 = por %p79, %p80
      %p82 = scmp.ne.s32.totalorder %s74, %s76
      %p83 = scmp.eq.s32.totalorder %s24, 1
      %p84 = por %p82, %p83
      %p85 = scmp.ne.s32.totalorder %s76, %s77
      %p86 = scmp.eq.s32.totalorder %s24, 0
      %p87 = por %p85, %p86
      %p88 = scmp.ne.s32.totalorder %s76, %s77
      %p89 = scmp.eq.s32.totalorder %s25, 1
      %p90 = por %p88, %p89
      %p92 = scmp.ne.s32.totalorder %s77, %s91
      %p93 = scmp.eq.s32.totalorder %s25, 0
      %p94 = por %p92, %p93
      %s96 = sadd.s32 %s95, 1
      %p99 = scmp.eq.s32.totalorder %s19, 1
      %p100 = scmp.ne.s32.totalorder %s95, %s97
      %p101 = scmp.eq.s32.totalorder %s19, 0
      %p102 = por %p100, %p101
      %p103 = scmp.ne.s32.totalorder %s95, %s97
      %p104 = scmp.eq.s32.totalorder %s24, 1
      %p105 = por %p103, %p104
      %p106 = scmp.ne.s32.totalorder %s97, %s98
      %p107 = scmp.eq.s32.totalorder %s24, 0
      %p108 = por %p106, %p107
      %p109 = scmp.ne.s32.totalorder %s97, %s98
      %p110 = scmp.eq.s32.totalorder %s25, 1
      %p111 = por %p109, %p110
      %p113 = scmp.ne.s32.totalorder %s98, %s112
      %p114 = scmp.eq.s32.totalorder %s25, 0
      %p115 = por %p113, %p114
      %s117 = sadd.s32 %s116, 1
      %p120 = scmp.eq.s32.totalorder %s19, 1
      %p121 = scmp.ne.s32.totalorder %s116, %s118
      %p122 = scmp.eq.s32.totalorder %s19, 0
      %p123 = por %p121, %p122
      %p124 = scmp.ne.s32.totalorder %s116, %s118
      %p125 = scmp.eq.s32.totalorder %s24, 1
      %p126 = por %p124, %p125
      %p127 = scmp.ne.s32.totalorder %s118, %s119
      %p128 = scmp.eq.s32.totalorder %s24, 0
      %p129 = por %p127, %p128
      %p130 = scmp.ne.s32.totalorder %s118, %s119
      %p131 = scmp.eq.s32.totalorder %s25, 1
      %p132 = por %p130, %p131
      %p134 = scmp.ne.s32.totalorder %s119, %s133
      %p135 = scmp.eq.s32.totalorder %s25, 0
      %p136 = por %p134, %p135
      %s138 = sadd.s32 %s137, 1
      %p141 = scmp.eq.s32.totalorder %s19, 1
      %p142 = scmp.ne.s32.totalorder %s137, %s139
      %p143 = scmp.eq.s32.totalorder %s19, 0
      %p144 = por %p142, %p143
      %p145 = scmp.ne.s32.totalorder %s137, %s139
      %p146 = scmp.eq.s32.totalorder %s24, 1
      %p147 = por %p145, %p146
      %p148 = scmp.ne.s32.totalorder %s139, %s140
      %p149 = scmp.eq.s32.totalorder %s24, 0
      %p150 = por %p148, %p149
      %p151 = scmp.ne.s32.totalorder %s139, %s140
      %p152 = scmp.eq.s32.totalorder %s25, 1
      %p153 = por %p151, %p152
      %p155 = scmp.ne.s32.totalorder %s140, %s154
      %p156 = scmp.eq.s32.totalorder %s25, 0
      %p157 = por %p155, %p156
      %s159 = sadd.s32 %s158, 1
      %p162 = scmp.eq.s32.totalorder %s19, 1
      %p163 = scmp.ne.s32.totalorder %s158, %s160
      %p164 = scmp.eq.s32.totalorder %s19, 0
      %p165 = por %p163, %p164
      %p166 = scmp.ne.s32.totalorder %s158, %s160
      %p167 = scmp.eq.s32.totalorder %s24, 1
      %p168 = por %p166, %p167
      %p169 = scmp.ne.s32.totalorder %s160, %s161
      %p170 = scmp.eq.s32.totalorder %s24, 0
      %p171 = por %p169, %p170
      %p172 = scmp.ne.s32.totalorder %s160, %s161
      %p173 = scmp.eq.s32.totalorder %s25, 1
      %p174 = por %p172, %p173
      %p176 = scmp.ne.s32.totalorder %s161, %s175
      %p177 = scmp.eq.s32.totalorder %s25, 0
      %p178 = por %p176, %p177
      %s180 = sadd.s32 %s179, 1
      %p183 = scmp.eq.s32.totalorder %s19, 1
      %p184 = scmp.ne.s32.totalorder %s179, %s181
      %p185 = scmp.eq.s32.totalorder %s19, 0
      %p186 = por %p184, %p185
      %p187 = scmp.ne.s32.totalorder %s179, %s181
      %p188 = scmp.eq.s32.totalorder %s24, 1
      %p189 = por %p187, %p188
      %p190 = scmp.ne.s32.totalorder %s181, %s182
      %p191 = scmp.eq.s32.totalorder %s24, 0
      %p192 = por %p190, %p191
      %p193 = scmp.ne.s32.totalorder %s181, %s182
      %p194 = scmp.eq.s32.totalorder %s25, 1
      %p195 = por %p193, %p194
      %p197 = scmp.ne.s32.totalorder %s182, %s196
      %p198 = scmp.eq.s32.totalorder %s25, 0
      %p199 = por %p197, %p198
      %s201 = sadd.s32 %s200, 1
      %p204 = scmp.eq.s32.totalorder %s19, 1
      %p205 = scmp.ne.s32.totalorder %s200, %s202
      %p206 = scmp.eq.s32.totalorder %s19, 0
      %p207 = por %p205, %p206
      %p208 = scmp.ne.s32.totalorder %s200, %s202
      %p209 = scmp.eq.s32.totalorder %s24, 1
      %p210 = por %p208, %p209
      %p211 = scmp.ne.s32.totalorder %s202, %s203
      %p212 = scmp.eq.s32.totalorder %s24, 0
      %p213 = por %p211, %p212
      %p214 = scmp.ne.s32.totalorder %s202, %s203
      %p215 = scmp.eq.s32.totalorder %s25, 1
      %p216 = por %p214, %p215
      %p218 = scmp.ne.s32.totalorder %s203, %s217
      %p219 = scmp.eq.s32.totalorder %s25, 0
      %p220 = por %p218, %p219
      %s222 = sadd.s32 %s221, 1
      %p225 = scmp.eq.s32.totalorder %s19, 1
      %p226 = scmp.ne.s32.totalorder %s221, %s223
      %p227 = scmp.eq.s32.totalorder %s19, 0
      %p228 = por %p226, %p227
      %p229 = scmp.ne.s32.totalorder %s221, %s223
      %p230 = scmp.eq.s32.totalorder %s24, 1
      %p231 = por %p229, %p230
      %p232 = scmp.ne.s32.totalorder %s223, %s224
      %p233 = scmp.eq.s32.totalorder %s24, 0
      %p234 = por %p232, %p233
      %p235 = scmp.ne.s32.totalorder %s223, %s224
      %p236 = scmp.eq.s32.totalorder %s25, 1
      %p237 = por %p235, %p236
      %p239 = scmp.ne.s32.totalorder %s224, %s238
      %p240 = scmp.eq.s32.totalorder %s25, 0
      %p241 = por %p239, %p240
      %s242 = ssub.s32 %s19, %s26
      %p243 = scmp.eq.s32.totalorder %s242, 0
      %s245 = sadd.s32 %s244, 1
      %s246 = scalar_select %p243, %s244, %s245
      %p249 = pneg %p243
      %p250 = scmp.eq.s32.totalorder %s19, 1
      %p251 = por %p249, %p250
      %p252 = scmp.ne.s32.totalorder %s244, %s247
      %p253 = scmp.eq.s32.totalorder %s19, 0
      %p254 = por %p252, %p253
      %p255 = scmp.ne.s32.totalorder %s244, %s247
      %p256 = scmp.eq.s32.totalorder %s24, 1
      %p257 = por %p255, %p256
      %p258 = scmp.ne.s32.totalorder %s247, %s248
      %p259 = scmp.eq.s32.totalorder %s24, 0
      %p260 = por %p258, %p259
      %p261 = scmp.ne.s32.totalorder %s247, %s248
      %p262 = scmp.eq.s32.totalorder %s25, 1
      %p263 = por %p261, %p262
      %p265 = scmp.ne.s32.totalorder %s248, %s264
      %p266 = scmp.eq.s32.totalorder %s25, 0
      %p267 = por %p265, %p266
      %p268 = scmp.le.s32.totalorder 1, %s19
      %p269 = scmp.lt.s32.totalorder %s19, 3
      %p270 = pnand %p268, %p269
      %p271 = pneg %p270
      // Predicated region
      $region9: #{tpu_custom_call.1} parent=5 // pred_check
        _
      $region10: #{tpu_custom_call.1} parent=5 // pred_check_branch
        %273 = sbr.rel (%p270) target = $region12
      $region11: #{tpu_custom_call.1} parent=5 // pred_region
        %s274 = ssub.s32 %s19, 1
        // Predicated region
        $region13: #{tpu_custom_call.1} parent=11 // pred_check
          %p275 = pneg %p66
        $region14: #{tpu_custom_call.1} parent=11 // pred_check_branch
          %277 = sbr.rel (%p275) target = $region16
        $region15: #{tpu_custom_call.1} parent=11 // pred_region
          _
        $region16: #{tpu_custom_call.1} parent=11 // pred_fallthru
          _
        // Predicated region
        $region17: #{tpu_custom_call.1} parent=11 // pred_check
          %p278 = pneg %p87
        $region18: #{tpu_custom_call.1} parent=11 // pred_check_branch
          %280 = sbr.rel (%p278) target = $region20
        $region19: #{tpu_custom_call.1} parent=11 // pred_region
          _
        $region20: #{tpu_custom_call.1} parent=11 // pred_fallthru
          _
        // Predicated region
        $region21: #{tpu_custom_call.1} parent=11 // pred_check
          %p281 = pneg %p108
        $region22: #{tpu_custom_call.1} parent=11 // pred_check_branch
          %283 = sbr.rel (%p281) target = $region24
        $region23: #{tpu_custom_call.1} parent=11 // pred_region
          _
        $region24: #{tpu_custom_call.1} parent=11 // pred_fallthru
          _
        // Predicated region
        $region25: #{tpu_custom_call.1} parent=11 // pred_check
          %p284 = pneg %p129
        $region26: #{tpu_custom_call.1} parent=11 // pred_check_branch
          %286 = sbr.rel (%p284) target = $region28
        $region27: #{tpu_custom_call.1} parent=11 // pred_region
          _
        $region28: #{tpu_custom_call.1} parent=11 // pred_fallthru
          _
        // Predicated region
        $region29: #{tpu_custom_call.1} parent=11 // pred_check
          %p287 = pneg %p150
        $region30: #{tpu_custom_call.1} parent=11 // pred_check_branch
          %289 = sbr.rel (%p287) target = $region32
        $region31: #{tpu_custom_call.1} parent=11 // pred_region
          _
        $region32: #{tpu_custom_call.1} parent=11 // pred_fallthru
          _
        // Predicated region
        $region33: #{tpu_custom_call.1} parent=11 // pred_check
          %p290 = pneg %p171
        $region34: #{tpu_custom_call.1} parent=11 // pred_check_branch
          %292 = sbr.rel (%p290) target = $region36
        $region35: #{tpu_custom_call.1} parent=11 // pred_region
          _
        $region36: #{tpu_custom_call.1} parent=11 // pred_fallthru
          _
        // Predicated region
        $region37: #{tpu_custom_call.1} parent=11 // pred_check
          %p293 = pneg %p192
        $region38: #{tpu_custom_call.1} parent=11 // pred_check_branch
          %295 = sbr.rel (%p293) target = $region40
        $region39: #{tpu_custom_call.1} parent=11 // pred_region
          _
        $region40: #{tpu_custom_call.1} parent=11 // pred_fallthru
          _
        // Predicated region
        $region41: #{tpu_custom_call.1} parent=11 // pred_check
          %p296 = pneg %p213
        $region42: #{tpu_custom_call.1} parent=11 // pred_check_branch
          %298 = sbr.rel (%p296) target = $region44
        $region43: #{tpu_custom_call.1} parent=11 // pred_region
          _
        $region44: #{tpu_custom_call.1} parent=11 // pred_fallthru
          _
        // Predicated region
        $region45: #{tpu_custom_call.1} parent=11 // pred_check
          %p299 = pneg %p234
        $region46: #{tpu_custom_call.1} parent=11 // pred_check_branch
          %301 = sbr.rel (%p299) target = $region48
        $region47: #{tpu_custom_call.1} parent=11 // pred_region
          _
        $region48: #{tpu_custom_call.1} parent=11 // pred_fallthru
          _
      $region12: #{tpu_custom_call.1} parent=5 // pred_fallthru
        _
      %p302 = scmp.lt.s32.totalorder %s19, 2
      // Predicated region
      $region49: #{tpu_custom_call.1} parent=5 // pred_check
        %p303 = pneg %p302
      $region50: #{tpu_custom_call.1} parent=5 // pred_check_branch
        %305 = sbr.rel (%p303) target = $region52
      $region51: #{tpu_custom_call.1} parent=5 // pred_region
        // Predicated region
        $region53: #{tpu_custom_call.1} parent=51 // pred_check
          %p306 = pneg %p39
        $region54: #{tpu_custom_call.1} parent=51 // pred_check_branch
          %308 = sbr.rel (%p306) target = $region56
        $region55: #{tpu_custom_call.1} parent=51 // pred_region
          %p309 = scmp.lt.s32.totalorder %s19, 1
          %s310 = scalar_select %p309, %s19, 1
          %s311 = smul.addr %s310, 2
          %s312 = smul.addr %s311, 4
          %s313 = scalar_lea.vmem %s0, %s312
        $region56: #{tpu_custom_call.1} parent=51 // pred_fallthru
          _
      $region52: #{tpu_custom_call.1} parent=5 // pred_fallthru
        _
      %p314 = scmp.le.s32.totalorder 1, %s19
      %p315 = scmp.lt.s32.totalorder %s19, 3
      %p316 = pnand %p314, %p315
      %p317 = pneg %p316
      // Predicated region
      $region57: #{tpu_custom_call.1} parent=5 // pred_check
        _
      $region58: #{tpu_custom_call.1} parent=5 // pred_check_branch
        %319 = sbr.rel (%p316) target = $region60
      $region59: #{tpu_custom_call.1} parent=5 // pred_region
        %s320 = ssub.s32 %s19, 1
        %p321 = scmp.lt.s32.totalorder %s24, 1
        %s322 = scalar_select %p321, %s24, 1
        %s323 = smul.addr %s322, 2
        %s324 = smul.addr %s323, 4
        %s325 = scalar_lea.vmem %s0, %s324
        %p326 = pneg %p45
        %p327 = pneg %p42
        %p328 = pneg %p66
        %p329 = pneg %p63
        %p330 = pneg %p87
        %p331 = pneg %p84
        %p332 = pneg %p108
        %p333 = pneg %p105
        %p334 = pneg %p129
        %p335 = pneg %p126
        %p336 = pneg %p150
        %p337 = pneg %p147
        %p338 = pneg %p171
        %p339 = pneg %p168
        %p340 = pneg %p192
        %p341 = pneg %p189
        %p342 = pneg %p213
        %p343 = pneg %p210
        %p344 = pneg %p234
        %p345 = pneg %p231
        %p346 = pneg %p260
        %p347 = pneg %p257
        %s348 = sand.u32 %s247, 1
        %s349 = scalar_lea.sflag [#allocation3], %s348
        %s350 = sand.u32 %s247, 1
        %s351 = smul.addr %s350, 16
        %s352 = scalar_lea.vmem [#allocation2], %s351
        %p353 = scmp.lt.s32.totalorder %s24, 1
        %s354 = scalar_select %p353, %s24, 1
        %s355 = smul.addr %s354, 2
        %s356 = smul.addr %s355, 4
        %s357 = scalar_lea.vmem %s0, %s356
        %v358 = vld [vmem:[%s357] sm:$0xff]
        %v359 = vld [vmem:[%s1] sm:$0xff]
        %v360 = vld [vmem:[%s2] sm:$0xff]
        %362 = vset.pattern.permute.xlu0 0
        %363 = vperm.xlu0 %362, %v360
        %v364 = vpop.permute.xlu0 %363
        %367 = vset.pattern.permute.xlu0 0
        %368 = vperm.xlu0 %367, %v359
        %v369 = vpop.permute.xlu0 %368
        %v372 = vlaneseq
        %v373 = vshrl.u32 %v372, 7
        %v374 = vsub.s32 0, %v373
        %v375 = vrot.slane %v358, %v374
        %v376 = vlaneseq
        %v377 = vshrl.u32 %v376, 7
        %v378 = vsub.s32 4, %v377
        %v379 = vrot.slane %v358, %v378
        %v382 = vlaneseq
        %v383 = vshrl.u32 %v382, 7
        %v384 = vsub.s32 0, %v383
        %v385 = vrot.slane %v375, %v384
        %v386 = vlaneseq
        %v387 = vshrl.u32 %v386, 7
        %v388 = vsub.s32 0, %v387
        %v389 = vrot.slane %v379, %v388
        %v390 = vmul.f32 %v369, %v385
        %v391 = vmul.f32 %v369, %v389
        %v392 = vadd.f32 %v364, %v390
        %v393 = vadd.f32 %v364, %v391
        %394 = vset.pattern.permute.xlu0 1
        %395 = vperm.xlu0 %394, %v359
        %v396 = vpop.permute.xlu0 %395
        %v398 = vlaneseq
        %v399 = vshrl.u32 %v398, 7
        %v400 = vsub.s32 1, %v399
        %v401 = vrot.slane %v358, %v400
        %v402 = vlaneseq
        %v403 = vshrl.u32 %v402, 7
        %v404 = vsub.s32 5, %v403
        %v405 = vrot.slane %v358, %v404
        %v408 = vlaneseq
        %v409 = vshrl.u32 %v408, 7
        %v410 = vsub.s32 1, %v409
        %v411 = vrot.slane %v401, %v410
        %v412 = vlaneseq
        %v413 = vshrl.u32 %v412, 7
        %v414 = vsub.s32 1, %v413
        %v415 = vrot.slane %v405, %v414
        %v416 = vmul.f32 %v396, %v411
        %v417 = vmul.f32 %v396, %v415
        %v418 = vadd.f32 %v392, %v416
        %v419 = vadd.f32 %v393, %v417
        %420 = vset.pattern.permute.xlu0 2
        %421 = vperm.xlu0 %420, %v359
        %v422 = vpop.permute.xlu0 %421
        %v424 = vlaneseq
        %v425 = vshrl.u32 %v424, 7
        %v426 = vsub.s32 2, %v425
        %v427 = vrot.slane %v358, %v426
        %v428 = vlaneseq
        %v429 = vshrl.u32 %v428, 7
        %v430 = vsub.s32 6, %v429
        %v431 = vrot.slane %v358, %v430
        %v434 = vlaneseq
        %v435 = vshrl.u32 %v434, 7
        %v436 = vsub.s32 2, %v435
        %v437 = vrot.slane %v427, %v436
        %v438 = vlaneseq
        %v439 = vshrl.u32 %v438, 7
        %v440 = vsub.s32 2, %v439
        %v441 = vrot.slane %v431, %v440
        %v442 = vmul.f32 %v422, %v437
        %v443 = vmul.f32 %v422, %v441
        %v444 = vadd.f32 %v418, %v442
        %v445 = vadd.f32 %v419, %v443
        %446 = vset.pattern.permute.xlu0 3
        %447 = vperm.xlu0 %446, %v359
        %v448 = vpop.permute.xlu0 %447
        %v450 = vlaneseq
        %v451 = vshrl.u32 %v450, 7
        %v452 = vsub.s32 3, %v451
        %v453 = vrot.slane %v358, %v452
        %v454 = vlaneseq
        %v455 = vshrl.u32 %v454, 7
        %v456 = vsub.s32 7, %v455
        %v457 = vrot.slane %v358, %v456
        %v460 = vlaneseq
        %v461 = vshrl.u32 %v460, 7
        %v462 = vsub.s32 3, %v461
        %v463 = vrot.slane %v453, %v462
        %v464 = vlaneseq
        %v465 = vshrl.u32 %v464, 7
        %v466 = vsub.s32 3, %v465
        %v467 = vrot.slane %v457, %v466
        %v468 = vmul.f32 %v448, %v463
        %v469 = vmul.f32 %v448, %v467
        %v470 = vadd.f32 %v444, %v468
        %v471 = vadd.f32 %v445, %v469
        %v472 = vadd.f32 %v470, %v471
        %473 = vadd.xlane.f32.xlu0 %v472
        %v474 = vpop.xlane.xlu0 %473
        %v475 = vmul.f32 %v470, %v470
        %v476 = vmul.f32 %v471, %v471
        %v477 = vadd.f32 %v475, %v476
        %478 = vadd.xlane.f32.xlu0 %v477
        %v479 = vpop.xlane.xlu0 %478
        %v480 = vmul.f32 %v474, 0.00390625
        %v481 = vmul.f32 %v479, 0.00390625
        %v482 = vmul.f32 %v480, %v480
        %v483 = vsub.f32 %v481, %v482
        %v484 = vmax.f32 %v483, 0.0
        %v485 = vsub.f32 %v470, %v480
        %v486 = vsub.f32 %v471, %v480
        %v487 = vadd.f32 %v484, 1e-05
        %v488 = vrsqrt.pop %v487
        %v489 = vmul.f32 %v485, %v488
        %v490 = vmul.f32 %v486, %v488
        %v491 = vmax.f32 %v489, 0.0
        %v492 = vmax.f32 %v490, 0.0
        %v493 = vld [vmem:[%s3] sm:$0xff]
        %v494 = vlaneseq
        %v495 = vand.u32 %v494, 127
        %v496 = vadd.s32 %v495, 128
        %vm497 = vcmp.lt.s32.totalorder %v495, 0
        %v498 = vsub.s32 0, %v495
        %v499 = vsel %vm497, %v498, %v495
        %v500 = vshrl.u32 %v499, 4
        %v501 = vand.u32 %v499, 15
        %v502 = vsub.s32 0, %v501
        %v503 = vsel %vm497, %v502, %v501
        %vm504 = vcmp.lt.s32.totalorder %v496, 0
        %v505 = vsub.s32 0, %v496
        %v506 = vsel %vm504, %v505, %v496
        %v507 = vshrl.u32 %v506, 4
        %v508 = vand.u32 %v506, 15
        %v509 = vsub.s32 0, %v508
        %v510 = vsel %vm504, %v509, %v508
        %vm511 = vcmp.ne.s32.totalorder %v503, 0
        %vm512 = vcmp.ne.s32.totalorder %v510, 0
        %vm513 = vcmp.lt.s32.totalorder %v503, 0
        %vm514 = vcmp.lt.s32.totalorder %v510, 0
        %vm515 = vmand %vm513, %vm511
        %vm516 = vmand %vm514, %vm512
        %v517 = vadd.s32 %v503, 16
        %v518 = vadd.s32 %v510, 16
        %v519 = vsel %vm515, %v517, %v503
        %v520 = vsel %vm516, %v518, %v510
        %vm521 = vcmp.ge.s32.totalorder %v495, 16
        %vm522 = vcmp.ge.s32.totalorder %v496, 16
        %vm523 = vcmp.lt.s32.totalorder %v495, 240
        %vm524 = vcmp.lt.s32.totalorder %v496, 240
        %vm525 = vcmp.ge.s32.totalorder %v519, 1
        %vm526 = vcmp.ge.s32.totalorder %v520, 1
        %vm527 = vcmp.le.s32.totalorder %v519, 14
        %vm528 = vcmp.le.s32.totalorder %v520, 14
        %530 = vset.pattern.permute.xlu0 9
        %531 = vperm.xlu0 %530, %v493
        %v532 = vpop.permute.xlu0 %531
        %534 = vrot.lane.b32.xlu0 %v491, 17
        %v535 = vpop.permute.xlu0 %534
        %536 = vrot.lane.b32.xlu0 %v492, 17
        %v537 = vpop.permute.xlu0 %536
        %vm538 = vcmp.lt.s32.totalorder %v495, 17
        %v539 = vsel %vm538, %v535, %v537
        %v540 = vsel %vm538, %v537, %v535
        %vm541 = vmand %vm521, %vm525
        %vm542 = vmand %vm522, %vm526
        %v543 = vsel %vm541, 1, 0
        %v544 = vsel %vm542, 1, 0
        %vm545 = vcmp.eq.s32.totalorder %v543, 1
        %vm546 = vcmp.eq.s32.totalorder %v544, 1
        %v547 = vsel %vm545, %v540, 0.0
        %v548 = vsel %vm546, %v539, 0.0
        %549 = vset.pattern.permute.xlu0 0
        %550 = vperm.xlu0 %549, %v493
        %v551 = vpop.permute.xlu0 %550
        %v553 = vmul.f32 %v547, %v551
        %v554 = vmul.f32 %v548, %v551
        %v555 = vadd.f32 %v532, %v553
        %v556 = vadd.f32 %v532, %v554
        %557 = vrot.lane.b32.xlu0 %v491, 16
        %v558 = vpop.permute.xlu0 %557
        %559 = vrot.lane.b32.xlu0 %v492, 16
        %v560 = vpop.permute.xlu0 %559
        %vm561 = vcmp.lt.s32.totalorder %v495, 16
        %v562 = vsel %vm561, %v558, %v560
        %v563 = vsel %vm561, %v560, %v558
        %v564 = vsel %vm521, 1, 0
        %v565 = vsel %vm522, 1, 0
        %vm566 = vcmp.eq.s32.totalorder %v564, 1
        %vm567 = vcmp.eq.s32.totalorder %v565, 1
        %v568 = vsel %vm566, %v563, 0.0
        %v569 = vsel %vm567, %v562, 0.0
        %570 = vset.pattern.permute.xlu0 1
        %571 = vperm.xlu0 %570, %v493
        %v572 = vpop.permute.xlu0 %571
        %v574 = vmul.f32 %v568, %v572
        %v575 = vmul.f32 %v569, %v572
        %v576 = vadd.f32 %v555, %v574
        %v577 = vadd.f32 %v556, %v575
        %578 = vrot.lane.b32.xlu0 %v491, 15
        %v579 = vpop.permute.xlu0 %578
        %580 = vrot.lane.b32.xlu0 %v492, 15
        %v581 = vpop.permute.xlu0 %580
        %vm582 = vcmp.lt.s32.totalorder %v495, 15
        %v583 = vsel %vm582, %v579, %v581
        %v584 = vsel %vm582, %v581, %v579
        %vm585 = vmand %vm521, %vm527
        %vm586 = vmand %vm522, %vm528
        %v587 = vsel %vm585, 1, 0
        %v588 = vsel %vm586, 1, 0
        %vm589 = vcmp.eq.s32.totalorder %v587, 1
        %vm590 = vcmp.eq.s32.totalorder %v588, 1
        %v591 = vsel %vm589, %v584, 0.0
        %v592 = vsel %vm590, %v583, 0.0
        %593 = vset.pattern.permute.xlu0 2
        %594 = vperm.xlu0 %593, %v493
        %v595 = vpop.permute.xlu0 %594
        %v597 = vmul.f32 %v591, %v595
        %v598 = vmul.f32 %v592, %v595
        %v599 = vadd.f32 %v576, %v597
        %v600 = vadd.f32 %v577, %v598
        %601 = vrot.lane.b32.xlu0 %v491, 1
        %v602 = vpop.permute.xlu0 %601
        %603 = vrot.lane.b32.xlu0 %v492, 1
        %v604 = vpop.permute.xlu0 %603
        %vm605 = vcmp.lt.s32.totalorder %v495, 1
        %v606 = vsel %vm605, %v602, %v604
        %v607 = vsel %vm605, %v604, %v602
        %v608 = vsel %vm525, 1, 0
        %v609 = vsel %vm526, 1, 0
        %vm610 = vcmp.eq.s32.totalorder %v608, 1
        %vm611 = vcmp.eq.s32.totalorder %v609, 1
        %v612 = vsel %vm610, %v607, 0.0
        %v613 = vsel %vm611, %v606, 0.0
        %614 = vset.pattern.permute.xlu0 3
        %615 = vperm.xlu0 %614, %v493
        %v616 = vpop.permute.xlu0 %615
        %v618 = vmul.f32 %v612, %v616
        %v619 = vmul.f32 %v613, %v616
        %v620 = vadd.f32 %v599, %v618
        %v621 = vadd.f32 %v600, %v619
        %622 = vset.pattern.permute.xlu0 4
        %623 = vperm.xlu0 %622, %v493
        %v624 = vpop.permute.xlu0 %623
        %v626 = vmul.f32 %v491, %v624
        %v627 = vmul.f32 %v492, %v624
        %v628 = vadd.f32 %v620, %v626
        %v629 = vadd.f32 %v621, %v627
        %630 = vrot.lane.b32.xlu0 %v491, 127
        %v631 = vpop.permute.xlu0 %630
        %632 = vrot.lane.b32.xlu0 %v492, 127
        %v633 = vpop.permute.xlu0 %632
        %vm634 = vcmp.lt.s32.totalorder %v495, 127
        %v635 = vsel %vm634, %v631, %v633
        %v636 = vsel %vm634, %v633, %v631
        %v637 = vsel %vm527, 1, 0
        %v638 = vsel %vm528, 1, 0
        %vm639 = vcmp.eq.s32.totalorder %v637, 1
        %vm640 = vcmp.eq.s32.totalorder %v638, 1
        %v641 = vsel %vm639, %v635, 0.0
        %v642 = vsel %vm640, %v636, 0.0
        %643 = vset.pattern.permute.xlu0 5
        %644 = vperm.xlu0 %643, %v493
        %v645 = vpop.permute.xlu0 %644
        %v647 = vmul.f32 %v641, %v645
        %v648 = vmul.f32 %v642, %v645
        %v649 = vadd.f32 %v628, %v647
        %v650 = vadd.f32 %v629, %v648
        %651 = vrot.lane.b32.xlu0 %v491, 113
        %v652 = vpop.permute.xlu0 %651
        %653 = vrot.lane.b32.xlu0 %v492, 113
        %v654 = vpop.permute.xlu0 %653
        %vm655 = vcmp.lt.s32.totalorder %v495, 113
        %v656 = vsel %vm655, %v652, %v654
        %v657 = vsel %vm655, %v654, %v652
        %vm658 = vmand %vm523, %vm525
        %vm659 = vmand %vm524, %vm526
        %v660 = vsel %vm658, 1, 0
        %v661 = vsel %vm659, 1, 0
        %vm662 = vcmp.eq.s32.totalorder %v660, 1
        %vm663 = vcmp.eq.s32.totalorder %v661, 1
        %v664 = vsel %vm662, %v656, 0.0
        %v665 = vsel %vm663, %v657, 0.0
        %666 = vset.pattern.permute.xlu0 6
        %667 = vperm.xlu0 %666, %v493
        %v668 = vpop.permute.xlu0 %667
        %v670 = vmul.f32 %v664, %v668
        %v671 = vmul.f32 %v665, %v668
        %v672 = vadd.f32 %v649, %v670
        %v673 = vadd.f32 %v650, %v671
        %674 = vrot.lane.b32.xlu0 %v491, 112
        %v675 = vpop.permute.xlu0 %674
        %676 = vrot.lane.b32.xlu0 %v492, 112
        %v677 = vpop.permute.xlu0 %676
        %vm678 = vcmp.lt.s32.totalorder %v495, 112
        %v679 = vsel %vm678, %v675, %v677
        %v680 = vsel %vm678, %v677, %v675
        %v681 = vsel %vm523, 1, 0
        %v682 = vsel %vm524, 1, 0
        %vm683 = vcmp.eq.s32.totalorder %v681, 1
        %vm684 = vcmp.eq.s32.totalorder %v682, 1
        %v685 = vsel %vm683, %v679, 0.0
        %v686 = vsel %vm684, %v680, 0.0
        %687 = vset.pattern.permute.xlu0 7
        %688 = vperm.xlu0 %687, %v493
        %v689 = vpop.permute.xlu0 %688
        %v691 = vmul.f32 %v685, %v689
        %v692 = vmul.f32 %v686, %v689
        %v693 = vadd.f32 %v672, %v691
        %v694 = vadd.f32 %v673, %v692
        %695 = vrot.lane.b32.xlu0 %v491, 111
        %v696 = vpop.permute.xlu0 %695
        %697 = vrot.lane.b32.xlu0 %v492, 111
        %v698 = vpop.permute.xlu0 %697
        %vm699 = vcmp.lt.s32.totalorder %v495, 111
        %v700 = vsel %vm699, %v696, %v698
        %v701 = vsel %vm699, %v698, %v696
        %vm702 = vmand %vm523, %vm527
        %vm703 = vmand %vm524, %vm528
        %v704 = vsel %vm702, 1, 0
        %v705 = vsel %vm703, 1, 0
        %vm706 = vcmp.eq.s32.totalorder %v704, 1
        %vm707 = vcmp.eq.s32.totalorder %v705, 1
        %v708 = vsel %vm706, %v700, 0.0
        %v709 = vsel %vm707, %v701, 0.0
        %710 = vset.pattern.permute.xlu0 8
        %711 = vperm.xlu0 %710, %v493
        %v712 = vpop.permute.xlu0 %711
        %v714 = vmul.f32 %v708, %v712
        %v715 = vmul.f32 %v709, %v712
        %v716 = vadd.f32 %v693, %v714
        %v717 = vadd.f32 %v694, %v715
        %v718 = vld [vmem:[%s4] sm:$0xff]
        %v719 = vld [vmem:[%s5] sm:$0xff]
        %721 = vset.pattern.permute.xlu0 0
        %722 = vperm.xlu0 %721, %v719
        %v723 = vpop.permute.xlu0 %722
        %726 = vset.pattern.permute.xlu0 0
        %727 = vperm.xlu0 %726, %v718
        %v728 = vpop.permute.xlu0 %727
        %v730 = vlaneseq
        %v731 = vshrl.u32 %v730, 7
        %v732 = vsub.s32 0, %v731
        %v733 = vrot.slane %v716, %v732
        %v734 = vlaneseq
        %v735 = vshrl.u32 %v734, 7
        %v736 = vsub.s32 0, %v735
        %v737 = vrot.slane %v717, %v736
        %v738 = vmul.f32 %v728, %v733
        %v739 = vmul.f32 %v728, %v737
        %v740 = vadd.f32 %v723, %v738
        %v741 = vadd.f32 %v723, %v739
        %742 = vset.pattern.permute.xlu0 1
        %743 = vperm.xlu0 %742, %v718
        %v744 = vpop.permute.xlu0 %743
        %v746 = vlaneseq
        %v747 = vshrl.u32 %v746, 7
        %v748 = vsub.s32 1, %v747
        %v749 = vrot.slane %v716, %v748
        %v750 = vlaneseq
        %v751 = vshrl.u32 %v750, 7
        %v752 = vsub.s32 1, %v751
        %v753 = vrot.slane %v717, %v752
        %v754 = vmul.f32 %v744, %v749
        %v755 = vmul.f32 %v744, %v753
        %v756 = vadd.f32 %v740, %v754
        %v757 = vadd.f32 %v741, %v755
        %758 = vset.pattern.permute.xlu0 2
        %759 = vperm.xlu0 %758, %v718
        %v760 = vpop.permute.xlu0 %759
        %v762 = vlaneseq
        %v763 = vshrl.u32 %v762, 7
        %v764 = vsub.s32 2, %v763
        %v765 = vrot.slane %v716, %v764
        %v766 = vlaneseq
        %v767 = vshrl.u32 %v766, 7
        %v768 = vsub.s32 2, %v767
        %v769 = vrot.slane %v717, %v768
        %v770 = vmul.f32 %v760, %v765
        %v771 = vmul.f32 %v760, %v769
        %v772 = vadd.f32 %v756, %v770
        %v773 = vadd.f32 %v757, %v771
        %774 = vset.pattern.permute.xlu0 3
        %775 = vperm.xlu0 %774, %v718
        %v776 = vpop.permute.xlu0 %775
        %v778 = vlaneseq
        %v779 = vshrl.u32 %v778, 7
        %v780 = vsub.s32 3, %v779
        %v781 = vrot.slane %v716, %v780
        %v782 = vlaneseq
        %v783 = vshrl.u32 %v782, 7
        %v784 = vsub.s32 3, %v783
        %v785 = vrot.slane %v717, %v784
        %v786 = vmul.f32 %v776, %v781
        %v787 = vmul.f32 %v776, %v785
        %v788 = vadd.f32 %v772, %v786
        %v789 = vadd.f32 %v773, %v787
        %790 = vset.pattern.permute.xlu0 4
        %791 = vperm.xlu0 %790, %v718
        %v792 = vpop.permute.xlu0 %791
        %v794 = vlaneseq
        %v795 = vshrl.u32 %v794, 7
        %v796 = vsub.s32 4, %v795
        %v797 = vrot.slane %v716, %v796
        %v798 = vlaneseq
        %v799 = vshrl.u32 %v798, 7
        %v800 = vsub.s32 4, %v799
        %v801 = vrot.slane %v717, %v800
        %v802 = vmul.f32 %v792, %v797
        %v803 = vmul.f32 %v792, %v801
        %v804 = vadd.f32 %v788, %v802
        %v805 = vadd.f32 %v789, %v803
        %806 = vset.pattern.permute.xlu0 5
        %807 = vperm.xlu0 %806, %v718
        %v808 = vpop.permute.xlu0 %807
        %v810 = vlaneseq
        %v811 = vshrl.u32 %v810, 7
        %v812 = vsub.s32 5, %v811
        %v813 = vrot.slane %v716, %v812
        %v814 = vlaneseq
        %v815 = vshrl.u32 %v814, 7
        %v816 = vsub.s32 5, %v815
        %v817 = vrot.slane %v717, %v816
        %v818 = vmul.f32 %v808, %v813
        %v819 = vmul.f32 %v808, %v817
        %v820 = vadd.f32 %v804, %v818
        %v821 = vadd.f32 %v805, %v819
        %822 = vset.pattern.permute.xlu0 6
        %823 = vperm.xlu0 %822, %v718
        %v824 = vpop.permute.xlu0 %823
        %v826 = vlaneseq
        %v827 = vshrl.u32 %v826, 7
        %v828 = vsub.s32 6, %v827
        %v829 = vrot.slane %v716, %v828
        %v830 = vlaneseq
        %v831 = vshrl.u32 %v830, 7
        %v832 = vsub.s32 6, %v831
        %v833 = vrot.slane %v717, %v832
        %v834 = vmul.f32 %v824, %v829
        %v835 = vmul.f32 %v824, %v833
        %v836 = vadd.f32 %v820, %v834
        %v837 = vadd.f32 %v821, %v835
        %838 = vset.pattern.permute.xlu0 7
        %839 = vperm.xlu0 %838, %v718
        %v840 = vpop.permute.xlu0 %839
        %v842 = vlaneseq
        %v843 = vshrl.u32 %v842, 7
        %v844 = vsub.s32 7, %v843
        %v845 = vrot.slane %v716, %v844
        %v846 = vlaneseq
        %v847 = vshrl.u32 %v846, 7
        %v848 = vsub.s32 7, %v847
        %v849 = vrot.slane %v717, %v848
        %v850 = vmul.f32 %v840, %v845
        %v851 = vmul.f32 %v840, %v849
        %v852 = vadd.f32 %v836, %v850
        %v853 = vadd.f32 %v837, %v851
        %v854 = vadd.f32 %v852, %v853
        %855 = vadd.xlane.f32.xlu0 %v854
        %v856 = vpop.xlane.xlu0 %855
        %v857 = vmul.f32 %v852, %v852
        %v858 = vmul.f32 %v853, %v853
        %v859 = vadd.f32 %v857, %v858
        %860 = vadd.xlane.f32.xlu0 %v859
        %v861 = vpop.xlane.xlu0 %860
        %v862 = vmul.f32 %v856, 0.00390625
        %v863 = vmul.f32 %v861, 0.00390625
        %v864 = vmul.f32 %v862, %v862
        %v865 = vsub.f32 %v863, %v864
        %v866 = vmax.f32 %v865, 0.0
        %v867 = vsub.f32 %v852, %v862
        %v868 = vsub.f32 %v853, %v862
        %v869 = vadd.f32 %v866, 1e-05
        %v870 = vrsqrt.pop %v869
        %v871 = vmul.f32 %v867, %v870
        %v872 = vmul.f32 %v868, %v870
        %v873 = vmax.f32 %v871, 0.0
        %v874 = vmax.f32 %v872, 0.0
        %v875 = vld [vmem:[%s6] sm:$0xff]
        %v876 = vld [vmem:[%s7] sm:$0xff]
        %878 = vset.pattern.permute.xlu0 0
        %879 = vperm.xlu0 %878, %v876
        %v880 = vpop.permute.xlu0 %879
        %883 = vset.pattern.permute.xlu0 0
        %884 = vperm.xlu0 %883, %v875
        %v885 = vpop.permute.xlu0 %884
        %v887 = vlaneseq
        %v888 = vshrl.u32 %v887, 7
        %v889 = vsub.s32 0, %v888
        %v890 = vrot.slane %v873, %v889
        %v891 = vlaneseq
        %v892 = vshrl.u32 %v891, 7
        %v893 = vsub.s32 0, %v892
        %v894 = vrot.slane %v874, %v893
        %v895 = vmul.f32 %v885, %v890
        %v896 = vmul.f32 %v885, %v894
        %v897 = vadd.f32 %v880, %v895
        %v898 = vadd.f32 %v880, %v896
        %899 = vset.pattern.permute.xlu0 1
        %900 = vperm.xlu0 %899, %v875
        %v901 = vpop.permute.xlu0 %900
        %v903 = vlaneseq
        %v904 = vshrl.u32 %v903, 7
        %v905 = vsub.s32 1, %v904
        %v906 = vrot.slane %v873, %v905
        %v907 = vlaneseq
        %v908 = vshrl.u32 %v907, 7
        %v909 = vsub.s32 1, %v908
        %v910 = vrot.slane %v874, %v909
        %v911 = vmul.f32 %v901, %v906
        %v912 = vmul.f32 %v901, %v910
        %v913 = vadd.f32 %v897, %v911
        %v914 = vadd.f32 %v898, %v912
        %915 = vset.pattern.permute.xlu0 2
        %916 = vperm.xlu0 %915, %v875
        %v917 = vpop.permute.xlu0 %916
        %v919 = vlaneseq
        %v920 = vshrl.u32 %v919, 7
        %v921 = vsub.s32 2, %v920
        %v922 = vrot.slane %v873, %v921
        %v923 = vlaneseq
        %v924 = vshrl.u32 %v923, 7
        %v925 = vsub.s32 2, %v924
        %v926 = vrot.slane %v874, %v925
        %v927 = vmul.f32 %v917, %v922
        %v928 = vmul.f32 %v917, %v926
        %v929 = vadd.f32 %v913, %v927
        %v930 = vadd.f32 %v914, %v928
        %931 = vset.pattern.permute.xlu0 3
        %932 = vperm.xlu0 %931, %v875
        %v933 = vpop.permute.xlu0 %932
        %v935 = vlaneseq
        %v936 = vshrl.u32 %v935, 7
        %v937 = vsub.s32 3, %v936
        %v938 = vrot.slane %v873, %v937
        %v939 = vlaneseq
        %v940 = vshrl.u32 %v939, 7
        %v941 = vsub.s32 3, %v940
        %v942 = vrot.slane %v874, %v941
        %v943 = vmul.f32 %v933, %v938
        %v944 = vmul.f32 %v933, %v942
        %v945 = vadd.f32 %v929, %v943
        %v946 = vadd.f32 %v930, %v944
        %947 = vset.pattern.permute.xlu0 4
        %948 = vperm.xlu0 %947, %v875
        %v949 = vpop.permute.xlu0 %948
        %v951 = vlaneseq
        %v952 = vshrl.u32 %v951, 7
        %v953 = vsub.s32 4, %v952
        %v954 = vrot.slane %v873, %v953
        %v955 = vlaneseq
        %v956 = vshrl.u32 %v955, 7
        %v957 = vsub.s32 4, %v956
        %v958 = vrot.slane %v874, %v957
        %v959 = vmul.f32 %v949, %v954
        %v960 = vmul.f32 %v949, %v958
        %v961 = vadd.f32 %v945, %v959
        %v962 = vadd.f32 %v946, %v960
        %963 = vset.pattern.permute.xlu0 5
        %964 = vperm.xlu0 %963, %v875
        %v965 = vpop.permute.xlu0 %964
        %v967 = vlaneseq
        %v968 = vshrl.u32 %v967, 7
        %v969 = vsub.s32 5, %v968
        %v970 = vrot.slane %v873, %v969
        %v971 = vlaneseq
        %v972 = vshrl.u32 %v971, 7
        %v973 = vsub.s32 5, %v972
        %v974 = vrot.slane %v874, %v973
        %v975 = vmul.f32 %v965, %v970
        %v976 = vmul.f32 %v965, %v974
        %v977 = vadd.f32 %v961, %v975
        %v978 = vadd.f32 %v962, %v976
        %979 = vset.pattern.permute.xlu0 6
        %980 = vperm.xlu0 %979, %v875
        %v981 = vpop.permute.xlu0 %980
        %v983 = vlaneseq
        %v984 = vshrl.u32 %v983, 7
        %v985 = vsub.s32 6, %v984
        %v986 = vrot.slane %v873, %v985
        %v987 = vlaneseq
        %v988 = vshrl.u32 %v987, 7
        %v989 = vsub.s32 6, %v988
        %v990 = vrot.slane %v874, %v989
        %v991 = vmul.f32 %v981, %v986
        %v992 = vmul.f32 %v981, %v990
        %v993 = vadd.f32 %v977, %v991
        %v994 = vadd.f32 %v978, %v992
        %995 = vset.pattern.permute.xlu0 7
        %996 = vperm.xlu0 %995, %v875
        %v997 = vpop.permute.xlu0 %996
        %v999 = vlaneseq
        %v1000 = vshrl.u32 %v999, 7
        %v1001 = vsub.s32 7, %v1000
        %v1002 = vrot.slane %v873, %v1001
        %v1003 = vlaneseq
        %v1004 = vshrl.u32 %v1003, 7
        %v1005 = vsub.s32 7, %v1004
        %v1006 = vrot.slane %v874, %v1005
        %v1007 = vmul.f32 %v997, %v1002
        %v1008 = vmul.f32 %v997, %v1006
        %v1009 = vadd.f32 %v993, %v1007
        %v1010 = vadd.f32 %v994, %v1008
        %v1011 = vadd.f32 %v1009, %v1010
        %1012 = vadd.xlane.f32.xlu0 %v1011
        %v1013 = vpop.xlane.xlu0 %1012
        %v1014 = vmul.f32 %v1009, %v1009
        %v1015 = vmul.f32 %v1010, %v1010
        %v1016 = vadd.f32 %v1014, %v1015
        %1017 = vadd.xlane.f32.xlu0 %v1016
        %v1018 = vpop.xlane.xlu0 %1017
        %v1019 = vmul.f32 %v1013, 0.00390625
        %v1020 = vmul.f32 %v1018, 0.00390625
        %v1021 = vmul.f32 %v1019, %v1019
        %v1022 = vsub.f32 %v1020, %v1021
        %v1023 = vmax.f32 %v1022, 0.0
        %v1024 = vsub.f32 %v1009, %v1019
        %v1025 = vsub.f32 %v1010, %v1019
        %v1026 = vadd.f32 %v1023, 1e-05
        %v1027 = vrsqrt.pop %v1026
        %v1028 = vmul.f32 %v1024, %v1027
        %v1029 = vmul.f32 %v1025, %v1027
        %v1030 = vmax.f32 %v1028, 0.0
        %v1031 = vmax.f32 %v1029, 0.0
        %v1032 = vld [vmem:[%s8] sm:$0xff]
        %v1033 = vld [vmem:[%s9] sm:$0xff]
        %1035 = vset.pattern.permute.xlu0 0
        %1036 = vperm.xlu0 %1035, %v1033
        %v1037 = vpop.permute.xlu0 %1036
        %1040 = vset.pattern.permute.xlu0 0
        %1041 = vperm.xlu0 %1040, %v1032
        %v1042 = vpop.permute.xlu0 %1041
        %v1044 = vmul.f32 %v1042, %v385
        %v1045 = vmul.f32 %v1042, %v389
        %v1046 = vadd.f32 %v1037, %v1044
        %v1047 = vadd.f32 %v1037, %v1045
        %1048 = vset.pattern.permute.xlu0 1
        %1049 = vperm.xlu0 %1048, %v1032
        %v1050 = vpop.permute.xlu0 %1049
        %v1052 = vmul.f32 %v1050, %v411
        %v1053 = vmul.f32 %v1050, %v415
        %v1054 = vadd.f32 %v1046, %v1052
        %v1055 = vadd.f32 %v1047, %v1053
        %1056 = vset.pattern.permute.xlu0 2
        %1057 = vperm.xlu0 %1056, %v1032
        %v1058 = vpop.permute.xlu0 %1057
        %v1060 = vmul.f32 %v1058, %v437
        %v1061 = vmul.f32 %v1058, %v441
        %v1062 = vadd.f32 %v1054, %v1060
        %v1063 = vadd.f32 %v1055, %v1061
        %1064 = vset.pattern.permute.xlu0 3
        %1065 = vperm.xlu0 %1064, %v1032
        %v1066 = vpop.permute.xlu0 %1065
        %v1068 = vmul.f32 %v1066, %v463
        %v1069 = vmul.f32 %v1066, %v467
        %v1070 = vadd.f32 %v1062, %v1068
        %v1071 = vadd.f32 %v1063, %v1069
        %v1072 = vadd.f32 %v1070, %v1071
        %1073 = vadd.xlane.f32.xlu0 %v1072
        %v1074 = vpop.xlane.xlu0 %1073
        %v1075 = vmul.f32 %v1070, %v1070
        %v1076 = vmul.f32 %v1071, %v1071
        %v1077 = vadd.f32 %v1075, %v1076
        %1078 = vadd.xlane.f32.xlu0 %v1077
        %v1079 = vpop.xlane.xlu0 %1078
        %v1080 = vmul.f32 %v1074, 0.00390625
        %v1081 = vmul.f32 %v1079, 0.00390625
        %v1082 = vmul.f32 %v1080, %v1080
        %v1083 = vsub.f32 %v1081, %v1082
        %v1084 = vmax.f32 %v1083, 0.0
        %v1085 = vsub.f32 %v1070, %v1080
        %v1086 = vsub.f32 %v1071, %v1080
        %v1087 = vadd.f32 %v1084, 1e-05
        %v1088 = vrsqrt.pop %v1087
        %v1089 = vmul.f32 %v1085, %v1088
        %v1090 = vmul.f32 %v1086, %v1088
        %v1091 = vmax.f32 %v1089, 0.0
        %v1092 = vmax.f32 %v1090, 0.0
        %v1093 = vadd.f32 %v1030, %v1091
        %v1094 = vadd.f32 %v1031, %v1092
        %1095 = vst [vmem:[%s352] sm:$0xff] %v1093
        %1096 = vst [vmem:[%s352 + $0x8] sm:$0xff] %v1094
        %s1097 = sand.u32 %s247, 1
        %s1098 = scalar_lea.sflag [#allocation3], %s1097
        %s1099 = sand.u32 %s247, 1
        %s1100 = smul.addr %s1099, 16
        %s1101 = scalar_lea.vmem [#allocation2], %s1100
        // Predicated region
        $region61: #{tpu_custom_call.1} parent=59 // pred_check
          %p1102 = pneg %p257
        $region62: #{tpu_custom_call.1} parent=59 // pred_check_branch
          %1104 = sbr.rel (%p1102) target = $region64
        $region63: #{tpu_custom_call.1} parent=59 // pred_region
          %s1106 = ssub.s32 256, 256
          %1107 = vsyncadd %s1098, %s1106
          %s1108 = smul.addr %s24, 2
          %s1109 = smul.addr %s1108, 128
          %s1110 = scalar_lea.hbm %s10, %s1109
          %s1112 = sshll.u32 %s1101, 4
          %s1113 = int_to_ptr.vmem [resolvable:$true] %s1112
          %1115 = dma.vmem_to_hbm [thread:$0]  %s1113, 256, %s1110, %s1098
        $region64: #{tpu_custom_call.1} parent=59 // pred_fallthru
          _
      $region60: #{tpu_custom_call.1} parent=5 // pred_fallthru
        _
      %p1116 = scmp.le.s32.totalorder 2, %s19
      // Predicated region
      $region65: #{tpu_custom_call.1} parent=5 // pred_check
        %p1117 = pneg %p1116
      $region66: #{tpu_custom_call.1} parent=5 // pred_check_branch
        %1119 = sbr.rel (%p1117) target = $region68
      $region67: #{tpu_custom_call.1} parent=5 // pred_region
        %s1120 = ssub.s32 %s19, 2
        // Predicated region
        $region69: #{tpu_custom_call.1} parent=67 // pred_check
          %p1121 = pneg %p263
        $region70: #{tpu_custom_call.1} parent=67 // pred_check_branch
          %1123 = sbr.rel (%p1121) target = $region72
        $region71: #{tpu_custom_call.1} parent=67 // pred_region
          %s1124 = sand.u32 %s248, 1
          %s1125 = scalar_lea.sflag [#allocation3], %s1124
          %s1126 = sand.u32 %s248, 1
          %s1127 = smul.addr %s1126, 16
          %s1128 = scalar_lea.vmem [#allocation2], %s1127
          %1129 = dma.done %s1125, 256
        $region72: #{tpu_custom_call.1} parent=67 // pred_fallthru
          _
      $region68: #{tpu_custom_call.1} parent=5 // pred_fallthru
        _
    $region6: #{tpu_custom_call.1} parent=1 // loop_footer
      %s23 = sadd.s32 1, %s19
    $region7: #{tpu_custom_call.1} parent=1 // loop_footer_branch
      %18 = sbr.rel target = $region3
    $region8: #{tpu_custom_call.1} parent=1 // loop_exit
      _
    %1130 = vsyncpa [#allocation3], 1
    %s1131 = scalar_lea.sflag [#allocation3], 1
    %1132 = vsyncpa %s1131, 1

</llo_original>
